<compile_context>
chip_gen: v7x
topology: tpu7x:2x2x1
jax: 0.10.0
libtpu: 0.0.40
codegen_flags: <defaults>
</compile_context>

<pallas_src>
import functools

import jax
import jax.numpy as jnp
from jax.experimental import pallas as pl
from jax.experimental.pallas import tpu as pltpu

BN_EPS = 1e-5        # torch.nn.BatchNorm1d default eps
NORM_EPS = 1e-12     # torch.nn.functional.normalize default eps


def _fused_kernel(x_ref, w1_ref, gamma_ref, beta_ref, w2_ref, o_ref, *scratch,
                  n_rows, block_rows, cache_h):
    if cache_h:
        h_cache, sum_acc, sq_acc, scale_s, shift_s = scratch
    else:
        sum_acc, sq_acc, scale_s, shift_s = scratch

    phase = pl.program_id(0)
    i = pl.program_id(1)
    num_tiles = pl.num_programs(1)

    @pl.when(phase == 0)
    def _stats():
        @pl.when(i == 0)
        def _():
            sum_acc[...] = jnp.zeros_like(sum_acc)
            sq_acc[...] = jnp.zeros_like(sq_acc)

        # h tile: (TM, D_in)bf16 @ (D_in, H)bf16 -> f32 accumulation on the MXU.
        # (Linear-1 bias omitted: it cancels exactly under train-mode BN.)
        h = jnp.dot(x_ref[...], w1_ref[...], preferred_element_type=jnp.float32)

        # Mask padded / out-of-bounds rows of the (possibly partial) tail tile.
        row = jax.lax.broadcasted_iota(jnp.int32, h.shape, 0) + i * block_rows
        valid = row < n_rows
        sum_acc[...] += jnp.sum(jnp.where(valid, h, 0.0), axis=0, keepdims=True)
        sq_acc[...] += jnp.sum(jnp.where(valid, h * h, 0.0), axis=0, keepdims=True)

        if cache_h:
            h_cache[i] = h.astype(h_cache.dtype)

        @pl.when(i == num_tiles - 1)
        def _():
            inv_n = 1.0 / n_rows
            mean = sum_acc[...] * inv_n
            var = jnp.maximum(sq_acc[...] * inv_n - mean * mean, 0.0)
            scale = gamma_ref[...] * jax.lax.rsqrt(var + BN_EPS)
            scale_s[...] = scale
            shift_s[...] = beta_ref[...] - mean * scale

    @pl.when(phase == 1)
    def _apply():
        if cache_h:
            h = h_cache[i].astype(jnp.float32)
        else:
            h = jnp.dot(x_ref[...], w1_ref[...],
                        preferred_element_type=jnp.float32)
        # Fused BatchNorm affine (single mul+add) then ReLU, in f32.
        h = jnp.maximum(h * scale_s[...] + shift_s[...], 0.0)
        # Linear 2 (no bias): bf16 operands, f32 accumulation.
        z = jnp.dot(h.astype(w2_ref.dtype), w2_ref[...],
                    preferred_element_type=jnp.float32)
        # F.normalize(z, dim=1): z / max(||z||, eps) == z * rsqrt(max(||z||^2, eps^2)).
        sumsq = jnp.sum(z * z, axis=1, keepdims=True)
        inv = jax.lax.rsqrt(jnp.maximum(sumsq, NORM_EPS * NORM_EPS))
        o_ref[...] = (z * inv).astype(o_ref.dtype)


def _cdiv(a, b):
    return -(-a // b)


def _round_up(a, m):
    return _cdiv(a, m) * m


def _vmem_budget_bytes():
    try:
        cap = int(pltpu.get_tpu_info().vmem_capacity_bytes)
        return int(cap * 0.75)
    except Exception:
        # Conservative fallback: assume v7x-sized VMEM (64 MiB per TC).
        return 48 * 1024 * 1024


def _estimate_vmem(tm, d_in, hid, d_out, cache_tiles, cache_bytes, out_bytes):
    bf16, f32 = 2, 4
    stream = 2 * tm * d_in * bf16 + 2 * tm * d_out * out_bytes        # double-buffered x / out
    resident = 2 * (d_in * hid * bf16 + hid * d_out * bf16 + 2 * hid * f32)
    scratch = cache_tiles * tm * hid * cache_bytes + 4 * hid * f32
    temps = 3 * tm * hid * f32 + 2 * tm * d_out * f32                 # h / z temporaries
    return stream + resident + scratch + temps


def _pick_config(n, d_in, hid, d_out, out_bytes, budget, block_rows):
    """Choose (tile_rows, num_tiles, cache_bytes, vmem_estimate)."""
    tile_candidates = [int(block_rows)] if block_rows else [1024, 512, 256, 128]
    for cache_bytes in (4, 2, 0):                 # f32 cache, bf16 cache, no cache
        for tm in tile_candidates:
            tm_eff = min(tm, _round_up(n, 8))     # keep sublane-aligned tiles
            n_tiles = _cdiv(n, tm_eff)
            need = _estimate_vmem(tm_eff, d_in, hid, d_out,
                                  n_tiles if cache_bytes else 0,
                                  cache_bytes, out_bytes)
            if need <= 0.8 * budget:
                return tm_eff, n_tiles, cache_bytes, need
    tm_eff = min(128, _round_up(n, 8))            # last resort: small tile, no cache
    n_tiles = _cdiv(n, tm_eff)
    return tm_eff, n_tiles, 0, _estimate_vmem(tm_eff, d_in, hid, d_out, 0, 0,
                                              out_bytes)


def nonlin_projection(x, w1, b1, gamma, beta, w2, *, block_rows=None,
                      out_dtype=jnp.float32):
    """x: (N, D_in); w1: (D_in, H); b1/gamma/beta: (1, H) or (H,); w2: (H, D_out)."""
    n, d_in = x.shape
    hid = w1.shape[1]
    d_out = w2.shape[1]

    out_bytes = jnp.dtype(out_dtype).itemsize
    budget = _vmem_budget_bytes()
    tm, num_tiles, cache_bytes, need = _pick_config(
        n, d_in, hid, d_out, out_bytes, budget, block_rows)
    cache_h = cache_bytes > 0
    cache_dtype = jnp.float32 if cache_bytes == 4 else jnp.bfloat16
    vmem_limit = int(min(budget, max(int(need * 1.5), 32 * 1024 * 1024)))

    # Mixed precision: bf16 operands for the MXU, f32 for elementwise math.
    xb = x.astype(jnp.bfloat16)
    w1b = w1.astype(jnp.bfloat16)
    w2b = w2.astype(jnp.bfloat16)
    gammaf = jnp.asarray(gamma, jnp.float32).reshape(1, hid)
    betaf = jnp.asarray(beta, jnp.float32).reshape(1, hid)
    # Linear-1 bias cancels exactly in train-mode BatchNorm (per-column constant
    # removed by mean subtraction); it is not needed for the forward output.
    del b1

    last = num_tiles - 1
    if cache_h:
        # Stream x only in phase 0; keep the index constant (== last tile) in
        # phase 1 so the window is never re-DMA'd.
        x_map = lambda p, i: (i * (1 - p) + last * p, 0)
    else:
        x_map = lambda p, i: (i, 0)               # recompute path: stream x twice
    const2 = lambda p, i: (0, 0)                  # residents (weights / BN vectors)
    out_map = lambda p, i: (i * p, 0)             # written only in phase 1

    scratch = []
    if cache_h:
        scratch.append(pltpu.VMEM((num_tiles, tm, hid), cache_dtype))
    scratch += [pltpu.VMEM((1, hid), jnp.float32)] * 4   # sum, sumsq, scale, shift

    mm1 = 2 * n * d_in * hid
    flops = (mm1 if cache_h else 2 * mm1) + 2 * n * hid * d_out
    bytes_accessed = ((1 if cache_h else 2) * n * d_in * 2
                      + d_in * hid * 2 + hid * d_out * 2 + 2 * hid * 4
                      + n * d_out * out_bytes)
    cost = pl.CostEstimate(flops=int(flops), transcendentals=int(hid + n),
                           bytes_accessed=int(bytes_accessed))

    kernel = functools.partial(_fused_kernel, n_rows=n, block_rows=tm,
                               cache_h=cache_h)

    out = pl.pallas_call(
        kernel,
        out_shape=jax.ShapeDtypeStruct((n, d_out), out_dtype),
        grid_spec=pltpu.PrefetchScalarGridSpec(
            num_scalar_prefetch=0,
            grid=(2, num_tiles),                  # (phase, row tile)
            in_specs=[pl.BlockSpec((tm, d_in), x_map),
                      pl.BlockSpec((d_in, hid), const2),
                      pl.BlockSpec((1, hid), const2),
                      pl.BlockSpec((1, hid), const2),
                      pl.BlockSpec((hid, d_out), const2)],
            out_specs=pl.BlockSpec((tm, d_out), out_map),
            scratch_shapes=scratch),
        compiler_params=pltpu.CompilerParams(
            dimension_semantics=("arbitrary", "arbitrary"),
            vmem_limit_bytes=vmem_limit),
        cost_estimate=cost,
    )(xb, w1b, gammaf, betaf, w2b)
    return out


def _reference(x, w1, b1, gamma, beta, w2):
    """Pure-JAX reference mirroring the kernel's precision policy (bf16 matmul
    operands, f32 accumulation, f32 elementwise)."""
    xb = x.astype(jnp.bfloat16)
    w1b = w1.astype(jnp.bfloat16)
    w2b = w2.astype(jnp.bfloat16)
    h = jnp.dot(xb, w1b, preferred_element_type=jnp.float32) \
        + jnp.asarray(b1, jnp.float32).reshape(1, -1)
    mean = h.mean(axis=0, keepdims=True)
    var = ((h - mean) ** 2).mean(axis=0, keepdims=True)
    h = (h - mean) * jax.lax.rsqrt(var + BN_EPS) * jnp.reshape(gamma, (1, -1)) \
        + jnp.reshape(beta, (1, -1))
    h = jnp.maximum(h, 0.0).astype(jnp.bfloat16)
    z = jnp.dot(h, w2b, preferred_element_type=jnp.float32)
    norm = jnp.maximum(jnp.sqrt(jnp.sum(z * z, axis=1, keepdims=True)), NORM_EPS)
    return z / norm


if __name__ == "__main__":
    # Non-divisible N exercises the masked tail tile; block_rows=128 gives 4
    # row tiles so the cross-tile BN reduction + cached-h apply are exercised.
    N, D_IN, HID, D_OUT = 500, 256, 256, 128
    BLOCK_ROWS = 128

    key = jax.random.PRNGKey(0)
    kx, kw1, kb1, kw2 = jax.random.split(key, 4)

    x = jax.random.normal(kx, (N, D_IN), dtype=jnp.float32)

    # Deterministic PyTorch-style uniform fan-in init.
    bound1 = 1.0 / (D_IN ** 0.5)
    w1 = jax.random.uniform(kw1, (D_IN, HID), minval=-bound1, maxval=bound1,
                            dtype=jnp.float32)
    b1 = jax.random.uniform(kb1, (1, HID), minval=-bound1, maxval=bound1,
                            dtype=jnp.float32)
    gamma = jnp.ones((1, HID), dtype=jnp.float32)    # BatchNorm1d init
    beta = jnp.zeros((1, HID), dtype=jnp.float32)
    bound2 = 1.0 / (HID ** 0.5)
    w2 = jax.random.uniform(kw2, (HID, D_OUT), minval=-bound2, maxval=bound2,
                            dtype=jnp.float32)

    out = nonlin_projection(x, w1, b1, gamma, beta, w2, block_rows=BLOCK_ROWS)
    out = jax.block_until_ready(out)

    ref = _reference(x, w1, b1, gamma, beta, w2)
    assert out.shape == (N, D_OUT)
    # Tolerance covers the bf16 rounding of activations feeding the MXU
    # (mirrored in the reference) plus accumulation-order noise.
    assert jnp.allclose(out, ref, atol=2e-3, rtol=2e-3), "mismatch vs reference"
    # Rows must be unit-norm (exact f32 rsqrt normalization).
    assert jnp.allclose(jnp.linalg.norm(out, axis=1), 1.0, atol=1e-4)

    # TODO(synk): BatchNorm1d running_mean/running_var buffer updates (train-mode
    # side effect) are not materialized; only the forward output is produced.
    print("KERNEL_OK")
</pallas_src>

<mosaic_0001>
module attributes {stable_mosaic.version = 11 : i64} {
  func.func @_fused_kernel(%arg0: i32, %arg1: i32, %arg2: memref<128x256xbf16, #tpu.memory_space<vmem>>, %arg3: memref<256x256xbf16, #tpu.memory_space<vmem>>, %arg4: memref<1x256xf32, #tpu.memory_space<vmem>>, %arg5: memref<1x256xf32, #tpu.memory_space<vmem>>, %arg6: memref<256x128xbf16, #tpu.memory_space<vmem>>, %arg7: memref<128x128xf32, #tpu.memory_space<vmem>>, %arg8: memref<4x128x256xf32, #tpu.memory_space<vmem>>, %arg9: memref<1x256xf32, #tpu.memory_space<vmem>>, %arg10: memref<1x256xf32, #tpu.memory_space<vmem>>, %arg11: memref<1x256xf32, #tpu.memory_space<vmem>>, %arg12: memref<1x256xf32, #tpu.memory_space<vmem>>) attributes {dimension_semantics = [#tpu.dimension_semantics<arbitrary>, #tpu.dimension_semantics<arbitrary>], iteration_bounds = array<i64: 2, 4>, scalar_prefetch = 0 : i64, scratch_operands = 5 : i64, tpu.core_type = #tpu.core_type<tc>, window_params = [{transform_indices = @transform_0, window_bounds = array<i64: 128, 256>}, {pipeline_mode = #tpu.pipeline_mode<synchronous>, transform_indices = @transform_1, window_bounds = array<i64: 256, 256>}, {pipeline_mode = #tpu.pipeline_mode<synchronous>, transform_indices = @transform_2, window_bounds = array<i64: 1, 256>}, {pipeline_mode = #tpu.pipeline_mode<synchronous>, transform_indices = @transform_3, window_bounds = array<i64: 1, 256>}, {pipeline_mode = #tpu.pipeline_mode<synchronous>, transform_indices = @transform_4, window_bounds = array<i64: 256, 128>}, {transform_indices = @transform_5, window_bounds = array<i64: 128, 128>}]} {
    %c0_i32 = arith.constant 0 : i32
    %0 = arith.cmpi eq, %arg0, %c0_i32 : i32
    %1 = arith.extui %0 : i1 to i32
    %c0_i32_0 = arith.constant 0 : i32
    %2 = arith.cmpi ne, %1, %c0_i32_0 : i32
    scf.if %2 {
      %c0_i32_2 = arith.constant 0 : i32
      %6 = arith.cmpi eq, %arg1, %c0_i32_2 : i32
      %7 = arith.extui %6 : i1 to i32
      %c0_i32_3 = arith.constant 0 : i32
      %8 = arith.cmpi ne, %7, %c0_i32_3 : i32
      scf.if %8 {
        %cst_22 = arith.constant 0.000000e+00 : f32
        %40 = vector.broadcast %cst_22 : f32 to vector<1x256xf32>
        %c0_23 = arith.constant 0 : index
        %c0_24 = arith.constant 0 : index
        %41 = vector.load %arg9[%c0_23, %c0_24] : memref<1x256xf32, #tpu.memory_space<vmem>>, vector<1x256xf32>
        tpu.vector_store %arg9[%c0_23, %c0_24], %40 {strides = array<i32>} : memref<1x256xf32, #tpu.memory_space<vmem>>, vector<1x256xf32>,
        %cst_25 = arith.constant 0.000000e+00 : f32
        %42 = vector.broadcast %cst_25 : f32 to vector<1x256xf32>
        %c0_26 = arith.constant 0 : index
        %c0_27 = arith.constant 0 : index
        %43 = vector.load %arg10[%c0_26, %c0_27] : memref<1x256xf32, #tpu.memory_space<vmem>>, vector<1x256xf32>
        tpu.vector_store %arg10[%c0_26, %c0_27], %42 {strides = array<i32>} : memref<1x256xf32, #tpu.memory_space<vmem>>, vector<1x256xf32>,
      } else {
      }
      %c0 = arith.constant 0 : index
      %c0_4 = arith.constant 0 : index
      %9 = vector.load %arg2[%c0, %c0_4] : memref<128x256xbf16, #tpu.memory_space<vmem>>, vector<128x256xbf16>
      %c0_5 = arith.constant 0 : index
      %c0_6 = arith.constant 0 : index
      %10 = vector.load %arg3[%c0_5, %c0_6] : memref<256x256xbf16, #tpu.memory_space<vmem>>, vector<256x256xbf16>
      %cst = arith.constant dense<0.000000e+00> : vector<128x256xf32>
      %11 = tpu.matmul %9, %10, %cst {dimension_numbers = #tpu.dot_dimension_numbers<[1], [0], [0], [1], [0, 0, 1, 1], [], []>} : vector<128x256xbf16>, vector<256x256xbf16>, vector<128x256xf32> -> vector<128x256xf32>
      %12 = tpu.iota {dimensions = array<i32: 0>} : vector<128x256xi32>
      %c128_i32 = arith.constant 128 : i32
      %13 = arith.muli %arg1, %c128_i32 : i32
      %14 = vector.broadcast %13 : i32 to vector<128x256xi32>
      %15 = arith.addi %12, %14 : vector<128x256xi32>
      %c500_i32 = arith.constant 500 : i32
      %16 = vector.broadcast %c500_i32 : i32 to vector<128x256xi32>
      %17 = arith.cmpi slt, %15, %16 : vector<128x256xi32>
      %c0_7 = arith.constant 0 : index
      %c0_8 = arith.constant 0 : index
      %18 = vector.load %arg9[%c0_7, %c0_8] : memref<1x256xf32, #tpu.memory_space<vmem>>, vector<1x256xf32>
      %cst_9 = arith.constant 0.000000e+00 : f32
      %19 = vector.broadcast %cst_9 : f32 to vector<128x256xf32>
      %20 = arith.select %17, %11, %19 : vector<128x256xi1>, vector<128x256xf32>
      %cst_10 = arith.constant dense<0.000000e+00> : vector<256xf32>
      %21 = vector.multi_reduction <add>, %20, %cst_10 [0] : vector<128x256xf32> to vector<256xf32>
      %22 = vector.shape_cast %21 : vector<256xf32> to vector<1x256xf32>
      %23 = arith.addf %18, %22 : vector<1x256xf32>
      %c0_11 = arith.constant 0 : index
      %c0_12 = arith.constant 0 : index
      %24 = vector.load %arg9[%c0_11, %c0_12] : memref<1x256xf32, #tpu.memory_space<vmem>>, vector<1x256xf32>
      tpu.vector_store %arg9[%c0_11, %c0_12], %23 {strides = array<i32>} : memref<1x256xf32, #tpu.memory_space<vmem>>, vector<1x256xf32>,
      %c0_13 = arith.constant 0 : index
      %c0_14 = arith.constant 0 : index
      %25 = vector.load %arg10[%c0_13, %c0_14] : memref<1x256xf32, #tpu.memory_space<vmem>>, vector<1x256xf32>
      %26 = arith.mulf %11, %11 : vector<128x256xf32>
      %cst_15 = arith.constant 0.000000e+00 : f32
      %27 = vector.broadcast %cst_15 : f32 to vector<128x256xf32>
      %28 = arith.select %17, %26, %27 : vector<128x256xi1>, vector<128x256xf32>
      %cst_16 = arith.constant dense<0.000000e+00> : vector<256xf32>
      %29 = vector.multi_reduction <add>, %28, %cst_16 [0] : vector<128x256xf32> to vector<256xf32>
      %30 = vector.shape_cast %29 : vector<256xf32> to vector<1x256xf32>
      %31 = arith.addf %25, %30 : vector<1x256xf32>
      %c0_17 = arith.constant 0 : index
      %c0_18 = arith.constant 0 : index
      %32 = vector.load %arg10[%c0_17, %c0_18] : memref<1x256xf32, #tpu.memory_space<vmem>>, vector<1x256xf32>
      tpu.vector_store %arg10[%c0_17, %c0_18], %31 {strides = array<i32>} : memref<1x256xf32, #tpu.memory_space<vmem>>, vector<1x256xf32>,
      %33 = arith.index_cast %arg1 : i32 to index
      %c0_19 = arith.constant 0 : index
      %c0_20 = arith.constant 0 : index
      %34 = vector.load %arg8[%33, %c0_19, %c0_20] : memref<4x128x256xf32, #tpu.memory_space<vmem>>, vector<1x128x256xf32>
      %35 = vector.shape_cast %34 : vector<1x128x256xf32> to vector<128x256xf32>
      %36 = vector.shape_cast %11 : vector<128x256xf32> to vector<1x128x256xf32>
      tpu.vector_store %arg8[%33, %c0_19, %c0_20], %36 {strides = array<i32>} : memref<4x128x256xf32, #tpu.memory_space<vmem>>, vector<1x128x256xf32>,
      %c3_i32 = arith.constant 3 : i32
      %37 = arith.cmpi eq, %arg1, %c3_i32 : i32
      %38 = arith.extui %37 : i1 to i32
      %c0_i32_21 = arith.constant 0 : i32
      %39 = arith.cmpi ne, %38, %c0_i32_21 : i32
      scf.if %39 {
        %c0_22 = arith.constant 0 : index
        %c0_23 = arith.constant 0 : index
        %40 = vector.load %arg9[%c0_22, %c0_23] : memref<1x256xf32, #tpu.memory_space<vmem>>, vector<1x256xf32>
        %cst_24 = arith.constant 2.000000e-03 : f32
        %41 = vector.broadcast %cst_24 : f32 to vector<1x256xf32>
        %42 = arith.mulf %40, %41 : vector<1x256xf32>
        %c0_25 = arith.constant 0 : index
        %c0_26 = arith.constant 0 : index
        %43 = vector.load %arg10[%c0_25, %c0_26] : memref<1x256xf32, #tpu.memory_space<vmem>>, vector<1x256xf32>
        %cst_27 = arith.constant 2.000000e-03 : f32
        %44 = vector.broadcast %cst_27 : f32 to vector<1x256xf32>
        %45 = arith.mulf %43, %44 : vector<1x256xf32>
        %46 = arith.mulf %42, %42 : vector<1x256xf32>
        %47 = arith.subf %45, %46 : vector<1x256xf32>
        %cst_28 = arith.constant 0.000000e+00 : f32
        %48 = vector.broadcast %cst_28 : f32 to vector<1x256xf32>
        %49 = arith.maximumf %47, %48 : vector<1x256xf32>
        %c0_29 = arith.constant 0 : index
        %c0_30 = arith.constant 0 : index
        %50 = vector.load %arg4[%c0_29, %c0_30] : memref<1x256xf32, #tpu.memory_space<vmem>>, vector<1x256xf32>
        %cst_31 = arith.constant 9.99999974E-6 : f32
        %51 = vector.broadcast %cst_31 : f32 to vector<1x256xf32>
        %52 = arith.addf %49, %51 : vector<1x256xf32>
        %53 = math.rsqrt %52 : vector<1x256xf32>
        %54 = arith.mulf %50, %53 : vector<1x256xf32>
        %c0_32 = arith.constant 0 : index
        %c0_33 = arith.constant 0 : index
        %55 = vector.load %arg11[%c0_32, %c0_33] : memref<1x256xf32, #tpu.memory_space<vmem>>, vector<1x256xf32>
        tpu.vector_store %arg11[%c0_32, %c0_33], %54 {strides = array<i32>} : memref<1x256xf32, #tpu.memory_space<vmem>>, vector<1x256xf32>,
        %c0_34 = arith.constant 0 : index
        %c0_35 = arith.constant 0 : index
        %56 = vector.load %arg5[%c0_34, %c0_35] : memref<1x256xf32, #tpu.memory_space<vmem>>, vector<1x256xf32>
        %57 = arith.mulf %42, %54 : vector<1x256xf32>
        %58 = arith.subf %56, %57 : vector<1x256xf32>
        %c0_36 = arith.constant 0 : index
        %c0_37 = arith.constant 0 : index
        %59 = vector.load %arg12[%c0_36, %c0_37] : memref<1x256xf32, #tpu.memory_space<vmem>>, vector<1x256xf32>
        tpu.vector_store %arg12[%c0_36, %c0_37], %58 {strides = array<i32>} : memref<1x256xf32, #tpu.memory_space<vmem>>, vector<1x256xf32>,
      } else {
      }
    } else {
    }
    %c1_i32 = arith.constant 1 : i32
    %3 = arith.cmpi eq, %arg0, %c1_i32 : i32
    %4 = arith.extui %3 : i1 to i32
    %c0_i32_1 = arith.constant 0 : i32
    %5 = arith.cmpi ne, %4, %c0_i32_1 : i32
    scf.if %5 {
      %6 = arith.index_cast %arg1 : i32 to index
      %c0 = arith.constant 0 : index
      %c0_2 = arith.constant 0 : index
      %7 = vector.load %arg8[%6, %c0, %c0_2] : memref<4x128x256xf32, #tpu.memory_space<vmem>>, vector<1x128x256xf32>
      %8 = vector.shape_cast %7 : vector<1x128x256xf32> to vector<128x256xf32>
      %c0_3 = arith.constant 0 : index
      %c0_4 = arith.constant 0 : index
      %9 = vector.load %arg11[%c0_3, %c0_4] : memref<1x256xf32, #tpu.memory_space<vmem>>, vector<1x256xf32>
      %10 = vector.broadcast %9 : vector<1x256xf32> to vector<128x256xf32>
      %11 = arith.mulf %8, %10 : vector<128x256xf32>
      %c0_5 = arith.constant 0 : index
      %c0_6 = arith.constant 0 : index
      %12 = vector.load %arg12[%c0_5, %c0_6] : memref<1x256xf32, #tpu.memory_space<vmem>>, vector<1x256xf32>
      %13 = vector.broadcast %12 : vector<1x256xf32> to vector<128x256xf32>
      %14 = arith.addf %11, %13 : vector<128x256xf32>
      %cst = arith.constant 0.000000e+00 : f32
      %15 = vector.broadcast %cst : f32 to vector<128x256xf32>
      %16 = arith.maximumf %14, %15 : vector<128x256xf32>
      %17 = arith.truncf %16 : vector<128x256xf32> to vector<128x256xbf16>
      %c0_7 = arith.constant 0 : index
      %c0_8 = arith.constant 0 : index
      %18 = vector.load %arg6[%c0_7, %c0_8] : memref<256x128xbf16, #tpu.memory_space<vmem>>, vector<256x128xbf16>
      %cst_9 = arith.constant dense<0.000000e+00> : vector<128x128xf32>
      %19 = tpu.matmul %17, %18, %cst_9 {dimension_numbers = #tpu.dot_dimension_numbers<[1], [0], [0], [1], [0, 0, 1, 1], [], []>} : vector<128x256xbf16>, vector<256x128xbf16>, vector<128x128xf32> -> vector<128x128xf32>
      %20 = arith.mulf %19, %19 : vector<128x128xf32>
      %cst_10 = arith.constant dense<0.000000e+00> : vector<128xf32>
      %21 = vector.multi_reduction <add>, %20, %cst_10 [1] : vector<128x128xf32> to vector<128xf32>
      %22 = vector.shape_cast %21 : vector<128xf32> to vector<128x1xf32>
      %cst_11 = arith.constant 1.000000e-24 : f32
      %23 = vector.broadcast %cst_11 : f32 to vector<128x1xf32>
      %24 = arith.maximumf %22, %23 : vector<128x1xf32>
      %25 = math.rsqrt %24 : vector<128x1xf32>
      %26 = vector.broadcast %25 : vector<128x1xf32> to vector<128x128xf32>
      %27 = arith.mulf %19, %26 : vector<128x128xf32>
      %c0_12 = arith.constant 0 : index
      %c0_13 = arith.constant 0 : index
      %28 = vector.load %arg7[%c0_12, %c0_13] : memref<128x128xf32, #tpu.memory_space<vmem>>, vector<128x128xf32>
      tpu.vector_store %arg7[%c0_12, %c0_13], %27 {strides = array<i32>} : memref<128x128xf32, #tpu.memory_space<vmem>>, vector<128x128xf32>,
    } else {
    }
    return
  }
  func.func @transform_0(%arg0: i32, %arg1: i32) -> (i32, i32) {
    %c1_i32 = arith.constant 1 : i32
    %0 = arith.subi %c1_i32, %arg0 : i32
    %1 = arith.muli %arg1, %0 : i32
    %c3_i32 = arith.constant 3 : i32
    %2 = arith.muli %c3_i32, %arg0 : i32
    %3 = arith.addi %1, %2 : i32
    %c0_i32 = arith.constant 0 : i32
    %c0_i32_0 = arith.constant 0 : i32
    return %3, %c0_i32 : i32, i32
  }
  func.func @transform_1(%arg0: i32, %arg1: i32) -> (i32, i32) {
    %c0_i32 = arith.constant 0 : i32
    %c0_i32_0 = arith.constant 0 : i32
    %c0_i32_1 = arith.constant 0 : i32
    return %c0_i32, %c0_i32_0 : i32, i32
  }
  func.func @transform_2(%arg0: i32, %arg1: i32) -> (i32, i32) {
    %c0_i32 = arith.constant 0 : i32
    %c0_i32_0 = arith.constant 0 : i32
    %c0_i32_1 = arith.constant 0 : i32
    return %c0_i32, %c0_i32_0 : i32, i32
  }
  func.func @transform_3(%arg0: i32, %arg1: i32) -> (i32, i32) {
    %c0_i32 = arith.constant 0 : i32
    %c0_i32_0 = arith.constant 0 : i32
    %c0_i32_1 = arith.constant 0 : i32
    return %c0_i32, %c0_i32_0 : i32, i32
  }
  func.func @transform_4(%arg0: i32, %arg1: i32) -> (i32, i32) {
    %c0_i32 = arith.constant 0 : i32
    %c0_i32_0 = arith.constant 0 : i32
    %c0_i32_1 = arith.constant 0 : i32
    return %c0_i32, %c0_i32_0 : i32, i32
  }
  func.func @transform_5(%arg0: i32, %arg1: i32) -> (i32, i32) {
    %0 = arith.muli %arg1, %arg0 : i32
    %c0_i32 = arith.constant 0 : i32
    %c0_i32_0 = arith.constant 0 : i32
    return %0, %c0_i32 : i32, i32
  }
}

</mosaic_0001>

<llo_original>
// kernel: tpu_custom_call.1
$region0: #{tpu_custom_call.1}
  #allocation0 [shape = 'u32[]', space=smem, size = 0x4, offset = 0x4, fixed_abs, tag = 'smem constant byte address 0x4 - core index']
  #allocation1 [shape = 'u32[144,128]{1,0:T(1,128)}', space=vmem, size = 0x12000, scoped, tag = 'internal scratch']
  #allocation2 [shape = 'f32[4,128,256]{2,1,0:T(8,128)}', space=vmem, size = 0x80000, scoped, tag = 'scratch operand']
  #allocation3 [shape = 'f32[1,256]{1,0:T(1,128)}', space=vmem, size = 0x400, scoped, tag = 'scratch operand']
  #allocation4 [shape = 'f32[1,256]{1,0:T(1,128)}', space=vmem, size = 0x400, scoped, tag = 'scratch operand']
  #allocation5 [shape = 'f32[1,256]{1,0:T(1,128)}', space=vmem, size = 0x400, scoped, tag = 'scratch operand']
  #allocation6 [shape = 'f32[1,256]{1,0:T(1,128)}', space=vmem, size = 0x400, scoped, tag = 'scratch operand']
  %s0 = inlined_call_operand.hbm [shape: bf16[500,256], index: 0, kind: input, shape index: {}]
  %s1 = inlined_call_operand.hbm [shape: bf16[256,256], index: 1, kind: input, shape index: {}]
  %s2 = inlined_call_operand.vmem [shape: f32[1,256], index: 2, kind: input, shape index: {}]
  %s3 = inlined_call_operand.vmem [shape: f32[1,256], index: 3, kind: input, shape index: {}]
  %s4 = inlined_call_operand.hbm [shape: bf16[256,128], index: 4, kind: input, shape index: {}]
  %s5 = inlined_call_operand.hbm [shape: f32[500,128], index: 5, kind: output, shape index: {}]
  %s6 = sld [smem:[#allocation0]]
  $region81: #{tpu_custom_call.1} parent=0
    _
  %s8 = ssub.s32 1, %s6
  %s9 = scalar_select 0, %s8, %s6
  $region1: #{tpu_custom_call.1} parent=0
    #allocation7 [shape = 'u8[131072]{0}', space=vmem, size = 0x20000, scoped, tag = 'input window, operand 0']
    #allocation8 [shape = 's32[2]{0}', space=sflag, size = 0x8, scoped, tag = 'scoped memory for tpu_custom_call.1']
    #allocation9 [shape = 's32[2]{0}', space=sflag, size = 0x8, scoped, tag = 'scoped memory for tpu_custom_call.1']
    #allocation10 [shape = 'u8[131072]{0}', space=vmem, size = 0x20000, scoped, tag = 'input window, operand 1, single buffered']
    #allocation11 [shape = 's32[1]{0}', space=sflag, size = 0x4, scoped, tag = 'scoped memory for tpu_custom_call.1']
    #allocation12 [shape = 'u8[65536]{0}', space=vmem, size = 0x10000, scoped, tag = 'input window, operand 4, single buffered']
    #allocation13 [shape = 'u8[131072]{0}', space=vmem, size = 0x20000, scoped, tag = 'output window, operand 0']
    %10 = vsyncpa [#allocation8], 0
    %s11 = scalar_lea.sflag [#allocation8], 1
    %12 = vsyncpa %s11, 0
    %13 = vsyncpa [#allocation11], 0
    %14 = vsyncpa [#allocation9], 0
    %s15 = scalar_lea.sflag [#allocation9], 1
    %16 = vsyncpa %s15, 0
    loop: start=0, step=1, limit=10
    $region2: #{tpu_custom_call.1} parent=1 // loop_pre_header
      _
    $region3: #{tpu_custom_call.1} parent=1 // loop_header
      %s18 = sphi 0, %s22
      %p19 = scmp.ge.s32.totalorder %s18, 10
      %s25 = sphi 0, %s37
      %s26 = sphi 0, %s33
      %s27 = sphi 0, %s25
      %s28 = sphi 0, %s26
      %s29 = sphi 0, %s27
      %s30 = sphi 0, %s28
      %s48 = sphi 0, %s50
      %s51 = sphi 0, %s48
      %s52 = sphi 0, %s51
      %s68 = sphi 0, %s52
      %s72 = sphi 0, %s72
      %s74 = sphi 0, %s72
      %s75 = sphi 0, %s74
      %s89 = sphi 0, %s75
      %s93 = sphi 0, %s93
      %s95 = sphi 0, %s93
      %s96 = sphi 0, %s95
      %s110 = sphi 0, %s96
      %s114 = sphi 0, %s114
      %s116 = sphi 0, %s114
      %s117 = sphi 0, %s116
      %s131 = sphi 0, %s117
      %s135 = sphi 0, %s135
      %s137 = sphi 0, %s135
      %s138 = sphi 0, %s137
      %s152 = sphi 0, %s138
      %s160 = sphi 0, %s162
      %s163 = sphi 0, %s160
      %s164 = sphi 0, %s163
      %s180 = sphi 0, %s164
    $region4: #{tpu_custom_call.1} parent=1 // loop_header_branch
      %21 = sbr.rel (%p19) target = $region8
    $region5: #{tpu_custom_call.1} parent=1 // loop_body
      %s23 = ssub.s32 %s18, 1
      %s24 = ssub.s32 %s18, 2
      %s31 = sadd.s32 1, %s26
      %p32 = scmp.ge.s32.totalorder %s31, 4
      %s33 = scalar_select %p32, 0, %s31
      %s34 = sadd.s32 1, %s25
      %s35 = scalar_select %p32, %s34, %s25
      %p36 = scmp.ge.s32.totalorder %s35, 2
      %s37 = scalar_select %p36, 0, %s35
      %s38 = ssub.s32 1, %s25
      %s39 = smul.u32 %s26, %s38
      %s40 = smul.u32 %s25, 3
      %s41 = sadd.s32 %s39, %s40
      %s42 = ssub.s32 1, %s37
      %s43 = smul.u32 %s33, %s42
      %s44 = smul.u32 %s37, 3
      %s45 = sadd.s32 %s43, %s44
      %s46 = ssub.s32 %s41, %s45
      %p47 = scmp.eq.s32.totalorder %s46, 0
      %s49 = sadd.s32 %s48, 1
      %s50 = scalar_select %p47, %s48, %s49
      %p53 = pneg %p47
      %p54 = scmp.eq.s32.totalorder %s18, 7
      %p55 = por %p53, %p54
      %p56 = scmp.ne.s32.totalorder %s48, %s51
      %p57 = scmp.eq.s32.totalorder %s18, 0
      %p58 = por %p56, %p57
      %p59 = scmp.ne.s32.totalorder %s48, %s51
      %p60 = scmp.eq.s32.totalorder %s23, 7
      %p61 = por %p59, %p60
      %p62 = scmp.ne.s32.totalorder %s51, %s52
      %p63 = scmp.eq.s32.totalorder %s23, 0
      %p64 = por %p62, %p63
      %p65 = scmp.ne.s32.totalorder %s51, %s52
      %p66 = scmp.eq.s32.totalorder %s24, 7
      %p67 = por %p65, %p66
      %p69 = scmp.ne.s32.totalorder %s52, %s68
      %p70 = scmp.eq.s32.totalorder %s24, 0
      %p71 = por %p69, %p70
      %s73 = sadd.s32 %s72, 1
      %p76 = scmp.eq.s32.totalorder %s18, 7
      %p77 = scmp.ne.s32.totalorder %s72, %s74
      %p78 = scmp.eq.s32.totalorder %s18, 0
      %p79 = por %p77, %p78
      %p80 = scmp.ne.s32.totalorder %s72, %s74
      %p81 = scmp.eq.s32.totalorder %s23, 7
      %p82 = por %p80, %p81
      %p83 = scmp.ne.s32.totalorder %s74, %s75
      %p84 = scmp.eq.s32.totalorder %s23, 0
      %p85 = por %p83, %p84
      %p86 = scmp.ne.s32.totalorder %s74, %s75
      %p87 = scmp.eq.s32.totalorder %s24, 7
      %p88 = por %p86, %p87
      %p90 = scmp.ne.s32.totalorder %s75, %s89
      %p91 = scmp.eq.s32.totalorder %s24, 0
      %p92 = por %p90, %p91
      %s94 = sadd.s32 %s93, 1
      %p97 = scmp.eq.s32.totalorder %s18, 7
      %p98 = scmp.ne.s32.totalorder %s93, %s95
      %p99 = scmp.eq.s32.totalorder %s18, 0
      %p100 = por %p98, %p99
      %p101 = scmp.ne.s32.totalorder %s93, %s95
      %p102 = scmp.eq.s32.totalorder %s23, 7
      %p103 = por %p101, %p102
      %p104 = scmp.ne.s32.totalorder %s95, %s96
      %p105 = scmp.eq.s32.totalorder %s23, 0
      %p106 = por %p104, %p105
      %p107 = scmp.ne.s32.totalorder %s95, %s96
      %p108 = scmp.eq.s32.totalorder %s24, 7
      %p109 = por %p107, %p108
      %p111 = scmp.ne.s32.totalorder %s96, %s110
      %p112 = scmp.eq.s32.totalorder %s24, 0
      %p113 = por %p111, %p112
      %s115 = sadd.s32 %s114, 1
      %p118 = scmp.eq.s32.totalorder %s18, 7
      %p119 = scmp.ne.s32.totalorder %s114, %s116
      %p120 = scmp.eq.s32.totalorder %s18, 0
      %p121 = por %p119, %p120
      %p122 = scmp.ne.s32.totalorder %s114, %s116
      %p123 = scmp.eq.s32.totalorder %s23, 7
      %p124 = por %p122, %p123
      %p125 = scmp.ne.s32.totalorder %s116, %s117
      %p126 = scmp.eq.s32.totalorder %s23, 0
      %p127 = por %p125, %p126
      %p128 = scmp.ne.s32.totalorder %s116, %s117
      %p129 = scmp.eq.s32.totalorder %s24, 7
      %p130 = por %p128, %p129
      %p132 = scmp.ne.s32.totalorder %s117, %s131
      %p133 = scmp.eq.s32.totalorder %s24, 0
      %p134 = por %p132, %p133
      %s136 = sadd.s32 %s135, 1
      %p139 = scmp.eq.s32.totalorder %s18, 7
      %p140 = scmp.ne.s32.totalorder %s135, %s137
      %p141 = scmp.eq.s32.totalorder %s18, 0
      %p142 = por %p140, %p141
      %p143 = scmp.ne.s32.totalorder %s135, %s137
      %p144 = scmp.eq.s32.totalorder %s23, 7
      %p145 = por %p143, %p144
      %p146 = scmp.ne.s32.totalorder %s137, %s138
      %p147 = scmp.eq.s32.totalorder %s23, 0
      %p148 = por %p146, %p147
      %p149 = scmp.ne.s32.totalorder %s137, %s138
      %p150 = scmp.eq.s32.totalorder %s24, 7
      %p151 = por %p149, %p150
      %p153 = scmp.ne.s32.totalorder %s138, %s152
      %p154 = scmp.eq.s32.totalorder %s24, 0
      %p155 = por %p153, %p154
      %s156 = smul.u32 %s26, %s25
      %s157 = smul.u32 %s33, %s37
      %s158 = ssub.s32 %s156, %s157
      %p159 = scmp.eq.s32.totalorder %s158, 0
      %s161 = sadd.s32 %s160, 1
      %s162 = scalar_select %p159, %s160, %s161
      %p165 = pneg %p159
      %p166 = scmp.eq.s32.totalorder %s18, 7
      %p167 = por %p165, %p166
      %p168 = scmp.ne.s32.totalorder %s160, %s163
      %p169 = scmp.eq.s32.totalorder %s18, 0
      %p170 = por %p168, %p169
      %p171 = scmp.ne.s32.totalorder %s160, %s163
      %p172 = scmp.eq.s32.totalorder %s23, 7
      %p173 = por %p171, %p172
      %p174 = scmp.ne.s32.totalorder %s163, %s164
      %p175 = scmp.eq.s32.totalorder %s23, 0
      %p176 = por %p174, %p175
      %p177 = scmp.ne.s32.totalorder %s163, %s164
      %p178 = scmp.eq.s32.totalorder %s24, 7
      %p179 = por %p177, %p178
      %p181 = scmp.ne.s32.totalorder %s164, %s180
      %p182 = scmp.eq.s32.totalorder %s24, 0
      %p183 = por %p181, %p182
      %p184 = scmp.le.s32.totalorder 1, %s18
      %p185 = scmp.lt.s32.totalorder %s18, 9
      %p186 = pnand %p184, %p185
      %p187 = pneg %p186
      // Predicated region
      $region9: #{tpu_custom_call.1} parent=5 // pred_check
        _
      $region10: #{tpu_custom_call.1} parent=5 // pred_check_branch
        %189 = sbr.rel (%p186) target = $region12
      $region11: #{tpu_custom_call.1} parent=5 // pred_region
        %s190 = ssub.s32 %s18, 1
        // Predicated region
        $region13: #{tpu_custom_call.1} parent=11 // pred_check
          %p191 = pneg %p85
        $region14: #{tpu_custom_call.1} parent=11 // pred_check_branch
          %193 = sbr.rel (%p191) target = $region16
        $region15: #{tpu_custom_call.1} parent=11 // pred_region
          %s195 = ssub.s32 4096, 4096
          %196 = vsyncadd [#allocation11], %s195
          %s197 = sshll.u32 [#allocation10], 4
          %s198 = int_to_ptr.vmem [resolvable:$true] %s197
          %203 = dma.hbm_to_vmem [thread:$0]  %s1, 4096, %s198, [#allocation11], 128, 128, 8
        $region16: #{tpu_custom_call.1} parent=11 // pred_fallthru
          _
        // Predicated region
        $region17: #{tpu_custom_call.1} parent=11 // pred_check
          %p204 = pneg %p106
        $region18: #{tpu_custom_call.1} parent=11 // pred_check_branch
          %206 = sbr.rel (%p204) target = $region20
        $region19: #{tpu_custom_call.1} parent=11 // pred_region
          _
        $region20: #{tpu_custom_call.1} parent=11 // pred_fallthru
          _
        // Predicated region
        $region21: #{tpu_custom_call.1} parent=11 // pred_check
          %p207 = pneg %p127
        $region22: #{tpu_custom_call.1} parent=11 // pred_check_branch
          %209 = sbr.rel (%p207) target = $region24
        $region23: #{tpu_custom_call.1} parent=11 // pred_region
          _
        $region24: #{tpu_custom_call.1} parent=11 // pred_fallthru
          _
        // Predicated region
        $region25: #{tpu_custom_call.1} parent=11 // pred_check
          %p210 = pneg %p148
        $region26: #{tpu_custom_call.1} parent=11 // pred_check_branch
          %212 = sbr.rel (%p210) target = $region28
        $region27: #{tpu_custom_call.1} parent=11 // pred_region
          %s214 = ssub.s32 2048, 2048
          %215 = vsyncadd [#allocation11], %s214
          %s216 = sshll.u32 [#allocation12], 4
          %s217 = int_to_ptr.vmem [resolvable:$true] %s216
          %222 = dma.hbm_to_vmem [thread:$0]  %s4, 2048, %s217, [#allocation11], 64, 64, 4
        $region28: #{tpu_custom_call.1} parent=11 // pred_fallthru
          _
      $region12: #{tpu_custom_call.1} parent=5 // pred_fallthru
        _
      %p223 = scmp.lt.s32.totalorder %s18, 8
      // Predicated region
      $region29: #{tpu_custom_call.1} parent=5 // pred_check
        %p224 = pneg %p223
      $region30: #{tpu_custom_call.1} parent=5 // pred_check_branch
        %226 = sbr.rel (%p224) target = $region32
      $region31: #{tpu_custom_call.1} parent=5 // pred_region
        // Predicated region
        $region33: #{tpu_custom_call.1} parent=31 // pred_check
          %p227 = pneg %p58
        $region34: #{tpu_custom_call.1} parent=31 // pred_check_branch
          %229 = sbr.rel (%p227) target = $region36
        $region35: #{tpu_custom_call.1} parent=31 // pred_region
          %s230 = sand.u32 %s48, 1
          %s231 = scalar_lea.sflag [#allocation8], %s230
          %s232 = sand.u32 %s48, 1
          %s233 = smul.addr %s232, 128
          %s234 = scalar_lea.vmem [#allocation7], %s233
          %s235 = ssub.s32 1, %s25
          %s236 = smul.u32 %s26, %s235
          %s237 = smul.u32 %s25, 3
          %s238 = sadd.s32 %s236, %s237
          %s239 = smul.u32 16, %s238
          %s240 = ssub.s32 63, %s239
          %p241 = scmp.lt.s32.totalorder %s240, 16
          %s242 = scalar_select %p241, %s240, 16
          %s243 = smul.u32 64, %s242
          %s244 = smul.u32 %s243, 2
          %s246 = ssub.s32 2048, %s244
          %247 = vsyncadd %s231, %s246
          %p248 = scmp.ne.s32.totalorder 0, %s244
          %s249 = smul.addr %s239, 2
          %s250 = smul.addr %s249, 64
          %s251 = scalar_lea.hbm %s0, %s250
          %s252 = smul.u32 8, %s242
          %s253 = sshll.u32 %s234, 4
          %s254 = int_to_ptr.vmem [resolvable:$true] %s253
          %s255 = sshll.u32 %s252, 4
          %259 = dma.hbm_to_vmem [thread:$0]  (%p248), %s251, %s255, %s254, %s231, 128, 128, 8
        $region36: #{tpu_custom_call.1} parent=31 // pred_fallthru
          _
      $region32: #{tpu_custom_call.1} parent=5 // pred_fallthru
        _
      %p260 = scmp.le.s32.totalorder 1, %s18
      %p261 = scmp.lt.s32.totalorder %s18, 9
      %p262 = pnand %p260, %p261
      %p263 = pneg %p262
      // Predicated region
      $region37: #{tpu_custom_call.1} parent=5 // pred_check
        _
      $region38: #{tpu_custom_call.1} parent=5 // pred_check_branch
        %265 = sbr.rel (%p262) target = $region40
      $region39: #{tpu_custom_call.1} parent=5 // pred_region
        %s266 = ssub.s32 %s18, 1
        %s267 = sand.u32 %s51, 1
        %s268 = scalar_lea.sflag [#allocation8], %s267
        %s269 = sand.u32 %s51, 1
        %s270 = smul.addr %s269, 128
        %s271 = scalar_lea.vmem [#allocation7], %s270
        // Predicated region
        $region41: #{tpu_custom_call.1} parent=39 // pred_check
          %p272 = pneg %p64
        $region42: #{tpu_custom_call.1} parent=39 // pred_check_branch
          %274 = sbr.rel (%p272) target = $region44
        $region43: #{tpu_custom_call.1} parent=39 // pred_region
          %275 = dma.done %s268, 2048
        $region44: #{tpu_custom_call.1} parent=39 // pred_fallthru
          _
        // Predicated region
        $region45: #{tpu_custom_call.1} parent=39 // pred_check
          %p276 = pneg %p85
        $region46: #{tpu_custom_call.1} parent=39 // pred_check_branch
          %278 = sbr.rel (%p276) target = $region48
        $region47: #{tpu_custom_call.1} parent=39 // pred_region
          %279 = dma.done [#allocation11], 4096
        $region48: #{tpu_custom_call.1} parent=39 // pred_fallthru
          _
        // Predicated region
        $region49: #{tpu_custom_call.1} parent=39 // pred_check
          %p280 = pneg %p148
        $region50: #{tpu_custom_call.1} parent=39 // pred_check_branch
          %282 = sbr.rel (%p280) target = $region52
        $region51: #{tpu_custom_call.1} parent=39 // pred_region
          %283 = dma.done [#allocation11], 2048
        $region52: #{tpu_custom_call.1} parent=39 // pred_fallthru
          _
        %s284 = sand.u32 %s51, 1
        %s285 = scalar_lea.sflag [#allocation8], %s284
        %s286 = sand.u32 %s51, 1
        %s287 = smul.addr %s286, 128
        %s288 = scalar_lea.vmem [#allocation7], %s287
        %p289 = pneg %p64
        %p290 = pneg %p61
        %p291 = pneg %p85
        %p292 = pneg %p82
        %p293 = pneg %p106
        %p294 = pneg %p103
        %p295 = pneg %p127
        %p296 = pneg %p124
        %p297 = pneg %p148
        %p298 = pneg %p145
        %p299 = pneg %p176
        %p300 = pneg %p173
        %s301 = sand.u32 %s163, 1
        %s302 = scalar_lea.sflag [#allocation9], %s301
        %s303 = sand.u32 %s163, 1
        %s304 = smul.addr %s303, 128
        %s305 = scalar_lea.vmem [#allocation13], %s304
        %s306 = ssub.s32 1, %s27
        %s307 = smul.u32 %s28, %s306
        %s308 = smul.u32 %s27, 3
        %s309 = sadd.s32 %s307, %s308
        %s310 = smul.u32 16, %s309
        %s311 = ssub.s32 63, %s310
        %p312 = scmp.lt.s32.totalorder %s311, 16
        %s313 = scalar_select %p312, %s311, 16
        %s314 = smul.u32 64, %s313
        %s315 = smul.u32 %s314, 2
        %s316 = smul.u32 %s28, %s27
        %s317 = smul.u32 16, %s316
        %s318 = ssub.s32 63, %s317
        %p319 = scmp.lt.s32.totalorder %s318, 16
        %s320 = scalar_select %p319, %s318, 16
        %s321 = smul.u32 128, %s320
        %p323 = scmp.eq.s32.totalorder %s27, 0
        // Predicated region
        $region53: #{tpu_custom_call.1} parent=39 // pred_check
          %p324 = pneg %p323
        $region54: #{tpu_custom_call.1} parent=39 // pred_check_branch
          %326 = sbr.rel (%p324) target = $region56
        $region55: #{tpu_custom_call.1} parent=39 // pred_region
          %p327 = scmp.eq.s32.totalorder %s28, 0
          // Predicated region
          $region57: #{tpu_custom_call.1} parent=55 // pred_check
            %p328 = pneg %p327
          $region58: #{tpu_custom_call.1} parent=55 // pred_check_branch
            %330 = sbr.rel (%p328) target = $region60
          $region59: #{tpu_custom_call.1} parent=55 // pred_region
            %v331 = vlaneseq
            %vm332 = vcmp.ge.s32.totalorder %v331, 0
            %vm333 = vcmp.lt.s32.totalorder %v331, 256
            %vm334 = vmand %vm332, %vm333
            %335 = vst.msk [vmem:[#allocation3] sm:$0x3] %vm334, 0.0
            %336 = vst.msk [vmem:[#allocation4] sm:$0x3] %vm334, 0.0
          $region60: #{tpu_custom_call.1} parent=55 // pred_fallthru
            _
          %v337 = vld [vmem:[%s271] sm:$0xff]
          %v338 = vld [vmem:[%s271 + $0x8] sm:$0xff]
          %v339 = vld [vmem:[%s271 + $0x10] sm:$0xff]
          %v340 = vld [vmem:[%s271 + $0x18] sm:$0xff]
          %v341 = vld [vmem:[%s271 + $0x20] sm:$0xff]
          %v342 = vld [vmem:[%s271 + $0x28] sm:$0xff]
          %v343 = vld [vmem:[%s271 + $0x30] sm:$0xff]
          %v344 = vld [vmem:[%s271 + $0x38] sm:$0xff]
          %v345 = vld [vmem:[%s271 + $0x40] sm:$0xff]
          %v346 = vld [vmem:[%s271 + $0x48] sm:$0xff]
          %v347 = vld [vmem:[%s271 + $0x50] sm:$0xff]
          %v348 = vld [vmem:[%s271 + $0x58] sm:$0xff]
          %v349 = vld [vmem:[%s271 + $0x60] sm:$0xff]
          %v350 = vld [vmem:[%s271 + $0x68] sm:$0xff]
          %v351 = vld [vmem:[%s271 + $0x70] sm:$0xff]
          %v352 = vld [vmem:[%s271 + $0x78] sm:$0xff]
          %v353 = vld [vmem:[#allocation10] sm:$0xff]
          %v354 = vld [vmem:[#allocation10 + $0x8] sm:$0xff]
          %v355 = vld [vmem:[#allocation10 + $0x10] sm:$0xff]
          %v356 = vld [vmem:[#allocation10 + $0x18] sm:$0xff]
          %v357 = vld [vmem:[#allocation10 + $0x20] sm:$0xff]
          %v358 = vld [vmem:[#allocation10 + $0x28] sm:$0xff]
          %v359 = vld [vmem:[#allocation10 + $0x30] sm:$0xff]
          %v360 = vld [vmem:[#allocation10 + $0x38] sm:$0xff]
          %v361 = vld [vmem:[#allocation10 + $0x40] sm:$0xff]
          %v362 = vld [vmem:[#allocation10 + $0x48] sm:$0xff]
          %v363 = vld [vmem:[#allocation10 + $0x50] sm:$0xff]
          %v364 = vld [vmem:[#allocation10 + $0x58] sm:$0xff]
          %v365 = vld [vmem:[#allocation10 + $0x60] sm:$0xff]
          %v366 = vld [vmem:[#allocation10 + $0x68] sm:$0xff]
          %v367 = vld [vmem:[#allocation10 + $0x70] sm:$0xff]
          %v368 = vld [vmem:[#allocation10 + $0x78] sm:$0xff]
          %v369 = vld [vmem:[#allocation10 + $0x80] sm:$0xff]
          %v370 = vld [vmem:[#allocation10 + $0x88] sm:$0xff]
          %v371 = vld [vmem:[#allocation10 + $0x90] sm:$0xff]
          %v372 = vld [vmem:[#allocation10 + $0x98] sm:$0xff]
          %v373 = vld [vmem:[#allocation10 + $0xa0] sm:$0xff]
          %v374 = vld [vmem:[#allocation10 + $0xa8] sm:$0xff]
          %v375 = vld [vmem:[#allocation10 + $0xb0] sm:$0xff]
          %v376 = vld [vmem:[#allocation10 + $0xb8] sm:$0xff]
          %v377 = vld [vmem:[#allocation10 + $0xc0] sm:$0xff]
          %v378 = vld [vmem:[#allocation10 + $0xc8] sm:$0xff]
          %v379 = vld [vmem:[#allocation10 + $0xd0] sm:$0xff]
          %v380 = vld [vmem:[#allocation10 + $0xd8] sm:$0xff]
          %v381 = vld [vmem:[#allocation10 + $0xe0] sm:$0xff]
          %v382 = vld [vmem:[#allocation10 + $0xe8] sm:$0xff]
          %v383 = vld [vmem:[#allocation10 + $0xf0] sm:$0xff]
          %v384 = vld [vmem:[#allocation10 + $0xf8] sm:$0xff]
          %v401 = vunpack.c.l.b16 %v337
          %v402 = vunpack.c.h.b16 %v337
          %v403 = vunpack.c.l.b16 %v338
          %v404 = vunpack.c.h.b16 %v338
          %v405 = vunpack.c.l.b16 %v339
          %v406 = vunpack.c.h.b16 %v339
          %v407 = vunpack.c.l.b16 %v340
          %v408 = vunpack.c.h.b16 %v340
          %v409 = vunpack.c.l.b16 %v341
          %v410 = vunpack.c.h.b16 %v341
          %v411 = vunpack.c.l.b16 %v342
          %v412 = vunpack.c.h.b16 %v342
          %v413 = vunpack.c.l.b16 %v343
          %v414 = vunpack.c.h.b16 %v343
          %v415 = vunpack.c.l.b16 %v344
          %v416 = vunpack.c.h.b16 %v344
          %v417 = vunpack.c.l.b16 %v345
          %v418 = vunpack.c.h.b16 %v345
          %v419 = vunpack.c.l.b16 %v346
          %v420 = vunpack.c.h.b16 %v346
          %v421 = vunpack.c.l.b16 %v347
          %v422 = vunpack.c.h.b16 %v347
          %v423 = vunpack.c.l.b16 %v348
          %v424 = vunpack.c.h.b16 %v348
          %v425 = vunpack.c.l.b16 %v349
          %v426 = vunpack.c.h.b16 %v349
          %v427 = vunpack.c.l.b16 %v350
          %v428 = vunpack.c.h.b16 %v350
          %v429 = vunpack.c.l.b16 %v351
          %v430 = vunpack.c.h.b16 %v351
          %v431 = vunpack.c.l.b16 %v352
          %v432 = vunpack.c.h.b16 %v352
          %v433 = vpack.c.b16 %v403, %v401
          %v434 = vpack.c.b16 %v404, %v402
          %v435 = vpack.c.b16 %v407, %v405
          %v436 = vpack.c.b16 %v408, %v406
          %v437 = vpack.c.b16 %v411, %v409
          %v438 = vpack.c.b16 %v412, %v410
          %v439 = vpack.c.b16 %v415, %v413
          %v440 = vpack.c.b16 %v416, %v414
          %v441 = vpack.c.b16 %v419, %v417
          %v442 = vpack.c.b16 %v420, %v418
          %v443 = vpack.c.b16 %v423, %v421
          %v444 = vpack.c.b16 %v424, %v422
          %v445 = vpack.c.b16 %v427, %v425
          %v446 = vpack.c.b16 %v428, %v426
          %v447 = vpack.c.b16 %v431, %v429
          %v448 = vpack.c.b16 %v432, %v430
          %v497 = vunpack.c.l.b16 %v353
          %v498 = vunpack.c.h.b16 %v353
          %v499 = vunpack.c.l.b16 %v354
          %v500 = vunpack.c.h.b16 %v354
          %v501 = vunpack.c.l.b16 %v355
          %v502 = vunpack.c.h.b16 %v355
          %v503 = vunpack.c.l.b16 %v356
          %v504 = vunpack.c.h.b16 %v356
          %v505 = vunpack.c.l.b16 %v357
          %v506 = vunpack.c.h.b16 %v357
          %v507 = vunpack.c.l.b16 %v358
          %v508 = vunpack.c.h.b16 %v358
          %v509 = vunpack.c.l.b16 %v359
          %v510 = vunpack.c.h.b16 %v359
          %v511 = vunpack.c.l.b16 %v360
          %v512 = vunpack.c.h.b16 %v360
          %v513 = vunpack.c.l.b16 %v361
          %v514 = vunpack.c.h.b16 %v361
          %v515 = vunpack.c.l.b16 %v362
          %v516 = vunpack.c.h.b16 %v362
          %v517 = vunpack.c.l.b16 %v363
          %v518 = vunpack.c.h.b16 %v363
          %v519 = vunpack.c.l.b16 %v364
          %v520 = vunpack.c.h.b16 %v364
          %v521 = vunpack.c.l.b16 %v365
          %v522 = vunpack.c.h.b16 %v365
          %v523 = vunpack.c.l.b16 %v366
          %v524 = vunpack.c.h.b16 %v366
          %v525 = vunpack.c.l.b16 %v367
          %v526 = vunpack.c.h.b16 %v367
          %v527 = vunpack.c.l.b16 %v368
          %v528 = vunpack.c.h.b16 %v368
          %v529 = vunpack.c.l.b16 %v369
          %v530 = vunpack.c.h.b16 %v369
          %v531 = vunpack.c.l.b16 %v370
          %v532 = vunpack.c.h.b16 %v370
          %v533 = vunpack.c.l.b16 %v371
          %v534 = vunpack.c.h.b16 %v371
          %v535 = vunpack.c.l.b16 %v372
          %v536 = vunpack.c.h.b16 %v372
          %v537 = vunpack.c.l.b16 %v373
          %v538 = vunpack.c.h.b16 %v373
          %v539 = vunpack.c.l.b16 %v374
          %v540 = vunpack.c.h.b16 %v374
          %v541 = vunpack.c.l.b16 %v375
          %v542 = vunpack.c.h.b16 %v375
          %v543 = vunpack.c.l.b16 %v376
          %v544 = vunpack.c.h.b16 %v376
          %v545 = vunpack.c.l.b16 %v377
          %v546 = vunpack.c.h.b16 %v377
          %v547 = vunpack.c.l.b16 %v378
          %v548 = vunpack.c.h.b16 %v378
          %v549 = vunpack.c.l.b16 %v379
          %v550 = vunpack.c.h.b16 %v379
          %v551 = vunpack.c.l.b16 %v380
          %v552 = vunpack.c.h.b16 %v380
          %v553 = vunpack.c.l.b16 %v381
          %v554 = vunpack.c.h.b16 %v381
          %v555 = vunpack.c.l.b16 %v382
          %v556 = vunpack.c.h.b16 %v382
          %v557 = vunpack.c.l.b16 %v383
          %v558 = vunpack.c.h.b16 %v383
          %v559 = vunpack.c.l.b16 %v384
          %v560 = vunpack.c.h.b16 %v384
          %v561 = vpack.c.b16 %v499, %v497
          %v562 = vpack.c.b16 %v500, %v498
          %v563 = vpack.c.b16 %v503, %v501
          %v564 = vpack.c.b16 %v504, %v502
          %v565 = vpack.c.b16 %v507, %v505
          %v566 = vpack.c.b16 %v508, %v506
          %v567 = vpack.c.b16 %v511, %v509
          %v568 = vpack.c.b16 %v512, %v510
          %v569 = vpack.c.b16 %v515, %v513
          %v570 = vpack.c.b16 %v516, %v514
          %v571 = vpack.c.b16 %v519, %v517
          %v572 = vpack.c.b16 %v520, %v518
          %v573 = vpack.c.b16 %v523, %v521
          %v574 = vpack.c.b16 %v524, %v522
          %v575 = vpack.c.b16 %v527, %v525
          %v576 = vpack.c.b16 %v528, %v526
          %v577 = vpack.c.b16 %v531, %v529
          %v578 = vpack.c.b16 %v532, %v530
          %v579 = vpack.c.b16 %v535, %v533
          %v580 = vpack.c.b16 %v536, %v534
          %v581 = vpack.c.b16 %v539, %v537
          %v582 = vpack.c.b16 %v540, %v538
          %v583 = vpack.c.b16 %v543, %v541
          %v584 = vpack.c.b16 %v544, %v542
          %v585 = vpack.c.b16 %v547, %v545
          %v586 = vpack.c.b16 %v548, %v546
          %v587 = vpack.c.b16 %v551, %v549
          %v588 = vpack.c.b16 %v552, %v550
          %v589 = vpack.c.b16 %v555, %v553
          %v590 = vpack.c.b16 %v556, %v554
          %v591 = vpack.c.b16 %v559, %v557
          %v592 = vpack.c.b16 %v560, %v558
          %625 = vmatprep.subr.bf16.mxu0 %v562
          %626 = vmatpush1.bf16.msra.mxu0 %v561
          %627 = vmatprep.subr.bf16.mxu0 %v564
          %628 = vmatpush1.bf16.msra.mxu0 %v563
          %629 = vmatprep.subr.bf16.mxu0 %v566
          %630 = vmatpush1.bf16.msra.mxu0 %v565
          %631 = vmatprep.subr.bf16.mxu0 %v568
          %632 = vmatpush1.bf16.msra.mxu0 %v567
          %633 = vmatprep.subr.bf16.mxu0 %v570
          %634 = vmatpush1.bf16.msra.mxu0 %v569
          %635 = vmatprep.subr.bf16.mxu0 %v572
          %636 = vmatpush1.bf16.msra.mxu0 %v571
          %637 = vmatprep.subr.bf16.mxu0 %v574
          %638 = vmatpush1.bf16.msra.mxu0 %v573
          %639 = vmatprep.subr.bf16.mxu0 %v576
          %640 = vmatpush1.bf16.msra.mxu0 %v575
          %641 = vmatprep.subr.bf16.mxu0 %v578
          %642 = vmatpush1.bf16.msra.mxu0 %v577
          %643 = vmatprep.subr.bf16.mxu0 %v580
          %644 = vmatpush1.bf16.msra.mxu0 %v579
          %645 = vmatprep.subr.bf16.mxu0 %v582
          %646 = vmatpush1.bf16.msra.mxu0 %v581
          %647 = vmatprep.subr.bf16.mxu0 %v584
          %648 = vmatpush1.bf16.msra.mxu0 %v583
          %649 = vmatprep.subr.bf16.mxu0 %v586
          %650 = vmatpush1.bf16.msra.mxu0 %v585
          %651 = vmatprep.subr.bf16.mxu0 %v588
          %652 = vmatpush1.bf16.msra.mxu0 %v587
          %653 = vmatprep.subr.bf16.mxu0 %v590
          %654 = vmatpush1.bf16.msra.mxu0 %v589
          %655 = vmatprep.subr.bf16.mxu0 %v592
          %656 = vmatpush1.bf16.msra.mxu0 %v591
          %657 = vmatprep.mubr.bf16.mxu0 %v434
          %658 = vmatmul.mubr.bf16.gmra.mrb[0].mxu0 %v433
          %v659 = vpop.f32.mrb[0].mxu0
          %v660 = vadd.f32 0.0, %v659
          %v661 = vpop.f32.mrb[0].mxu0
          %v662 = vadd.f32 0.0, %v661
          %v663 = vpop.f32.mrb[0].mxu0
          %v664 = vadd.f32 0.0, %v663
          %v665 = vpop.f32.mrb[0].mxu0
          %v666 = vadd.f32 0.0, %v665
          %667 = vmatprep.mubr.bf16.mxu0 %v436
          %668 = vmatmul.mubr.bf16.gmra.mrb[0].mxu0 %v435
          %v669 = vpop.f32.mrb[0].mxu0
          %v670 = vadd.f32 0.0, %v669
          %v671 = vpop.f32.mrb[0].mxu0
          %v672 = vadd.f32 0.0, %v671
          %v673 = vpop.f32.mrb[0].mxu0
          %v674 = vadd.f32 0.0, %v673
          %v675 = vpop.f32.mrb[0].mxu0
          %v676 = vadd.f32 0.0, %v675
          %677 = vmatprep.mubr.bf16.mxu0 %v438
          %678 = vmatmul.mubr.bf16.gmra.mrb[0].mxu0 %v437
          %v679 = vpop.f32.mrb[0].mxu0
          %v680 = vadd.f32 0.0, %v679
          %v681 = vpop.f32.mrb[0].mxu0
          %v682 = vadd.f32 0.0, %v681
          %v683 = vpop.f32.mrb[0].mxu0
          %v684 = vadd.f32 0.0, %v683
          %v685 = vpop.f32.mrb[0].mxu0
          %v686 = vadd.f32 0.0, %v685
          %687 = vmatprep.mubr.bf16.mxu0 %v440
          %688 = vmatmul.mubr.bf16.gmra.mrb[0].mxu0 %v439
          %v689 = vpop.f32.mrb[0].mxu0
          %v690 = vadd.f32 0.0, %v689
          %v691 = vpop.f32.mrb[0].mxu0
          %v692 = vadd.f32 0.0, %v691
          %v693 = vpop.f32.mrb[0].mxu0
          %v694 = vadd.f32 0.0, %v693
          %v695 = vpop.f32.mrb[0].mxu0
          %v696 = vadd.f32 0.0, %v695
          %697 = vmatprep.mubr.bf16.mxu0 %v442
          %698 = vmatmul.mubr.bf16.gmra.mrb[0].mxu0 %v441
          %v699 = vpop.f32.mrb[0].mxu0
          %v700 = vadd.f32 0.0, %v699
          %v701 = vpop.f32.mrb[0].mxu0
          %v702 = vadd.f32 0.0, %v701
          %v703 = vpop.f32.mrb[0].mxu0
          %v704 = vadd.f32 0.0, %v703
          %v705 = vpop.f32.mrb[0].mxu0
          %v706 = vadd.f32 0.0, %v705
          %707 = vmatprep.mubr.bf16.mxu0 %v444
          %708 = vmatmul.mubr.bf16.gmra.mrb[0].mxu0 %v443
          %v709 = vpop.f32.mrb[0].mxu0
          %v710 = vadd.f32 0.0, %v709
          %v711 = vpop.f32.mrb[0].mxu0
          %v712 = vadd.f32 0.0, %v711
          %v713 = vpop.f32.mrb[0].mxu0
          %v714 = vadd.f32 0.0, %v713
          %v715 = vpop.f32.mrb[0].mxu0
          %v716 = vadd.f32 0.0, %v715
          %717 = vmatprep.mubr.bf16.mxu0 %v446
          %718 = vmatmul.mubr.bf16.gmra.mrb[0].mxu0 %v445
          %v719 = vpop.f32.mrb[0].mxu0
          %v720 = vadd.f32 0.0, %v719
          %v721 = vpop.f32.mrb[0].mxu0
          %v722 = vadd.f32 0.0, %v721
          %v723 = vpop.f32.mrb[0].mxu0
          %v724 = vadd.f32 0.0, %v723
          %v725 = vpop.f32.mrb[0].mxu0
          %v726 = vadd.f32 0.0, %v725
          %727 = vmatprep.mubr.bf16.mxu0 %v448
          %728 = vmatmul.mubr.bf16.gmra.mrb[0].mxu0 %v447
          %v729 = vpop.f32.mrb[0].mxu0
          %v730 = vadd.f32 0.0, %v729
          %v731 = vpop.f32.mrb[0].mxu0
          %v732 = vadd.f32 0.0, %v731
          %v733 = vpop.f32.mrb[0].mxu0
          %v734 = vadd.f32 0.0, %v733
          %v735 = vpop.f32.mrb[0].mxu0
          %v736 = vadd.f32 0.0, %v735
          %737 = vdwg.mxu0
          %v738 = vlaneseq
          %v739 = vshrl.u32 %v738, 7
          %v740 = vadd.s32 %v739, 8
          %v741 = vadd.s32 %v739, 16
          %v742 = vadd.s32 %v739, 24
          %v743 = vadd.s32 %v739, 32
          %v744 = vadd.s32 %v739, 40
          %v745 = vadd.s32 %v739, 48
          %v746 = vadd.s32 %v739, 56
          %v747 = vadd.s32 %v739, 64
          %v748 = vadd.s32 %v739, 72
          %v749 = vadd.s32 %v739, 80
          %v750 = vadd.s32 %v739, 88
          %v751 = vadd.s32 %v739, 96
          %v752 = vadd.s32 %v739, 104
          %v753 = vadd.s32 %v739, 112
          %v754 = vadd.s32 %v739, 120
          %s755 = smul.u32 %s28, 128
          %v756 = vstv %s755
          %v757 = vadd.s32 %v739, %v756
          %v758 = vadd.s32 %v740, %v756
          %v759 = vadd.s32 %v741, %v756
          %v760 = vadd.s32 %v742, %v756
          %v761 = vadd.s32 %v743, %v756
          %v762 = vadd.s32 %v744, %v756
          %v763 = vadd.s32 %v745, %v756
          %v764 = vadd.s32 %v746, %v756
          %v765 = vadd.s32 %v747, %v756
          %v766 = vadd.s32 %v748, %v756
          %v767 = vadd.s32 %v749, %v756
          %v768 = vadd.s32 %v750, %v756
          %v769 = vadd.s32 %v751, %v756
          %v770 = vadd.s32 %v752, %v756
          %v771 = vadd.s32 %v753, %v756
          %v772 = vadd.s32 %v754, %v756
          %vm773 = vcmp.lt.s32.totalorder %v757, 500
          %vm774 = vcmp.lt.s32.totalorder %v758, 500
          %vm775 = vcmp.lt.s32.totalorder %v759, 500
          %vm776 = vcmp.lt.s32.totalorder %v760, 500
          %vm777 = vcmp.lt.s32.totalorder %v761, 500
          %vm778 = vcmp.lt.s32.totalorder %v762, 500
          %vm779 = vcmp.lt.s32.totalorder %v763, 500
          %vm780 = vcmp.lt.s32.totalorder %v764, 500
          %vm781 = vcmp.lt.s32.totalorder %v765, 500
          %vm782 = vcmp.lt.s32.totalorder %v766, 500
          %vm783 = vcmp.lt.s32.totalorder %v767, 500
          %vm784 = vcmp.lt.s32.totalorder %v768, 500
          %vm785 = vcmp.lt.s32.totalorder %v769, 500
          %vm786 = vcmp.lt.s32.totalorder %v770, 500
          %vm787 = vcmp.lt.s32.totalorder %v771, 500
          %vm788 = vcmp.lt.s32.totalorder %v772, 500
          %v789 = vld [vmem:[#allocation3] sm:$0x3]
          %v790 = vsel %vm773, %v660, 0.0
          %v791 = vsel %vm773, %v662, 0.0
          %v792 = vsel %vm774, %v664, 0.0
          %v793 = vsel %vm774, %v666, 0.0
          %v794 = vsel %vm775, %v670, 0.0
          %v795 = vsel %vm775, %v672, 0.0
          %v796 = vsel %vm776, %v674, 0.0
          %v797 = vsel %vm776, %v676, 0.0
          %v798 = vsel %vm777, %v680, 0.0
          %v799 = vsel %vm777, %v682, 0.0
          %v800 = vsel %vm778, %v684, 0.0
          %v801 = vsel %vm778, %v686, 0.0
          %v802 = vsel %vm779, %v690, 0.0
          %v803 = vsel %vm779, %v692, 0.0
          %v804 = vsel %vm780, %v694, 0.0
          %v805 = vsel %vm780, %v696, 0.0
          %v806 = vsel %vm781, %v700, 0.0
          %v807 = vsel %vm781, %v702, 0.0
          %v808 = vsel %vm782, %v704, 0.0
          %v809 = vsel %vm782, %v706, 0.0
          %v810 = vsel %vm783, %v710, 0.0
          %v811 = vsel %vm783, %v712, 0.0
          %v812 = vsel %vm784, %v714, 0.0
          %v813 = vsel %vm784, %v716, 0.0
          %v814 = vsel %vm785, %v720, 0.0
          %v815 = vsel %vm785, %v722, 0.0
          %v816 = vsel %vm786, %v724, 0.0
          %v817 = vsel %vm786, %v726, 0.0
          %v818 = vsel %vm787, %v730, 0.0
          %v819 = vsel %vm787, %v732, 0.0
          %v820 = vsel %vm788, %v734, 0.0
          %v821 = vsel %vm788, %v736, 0.0
          %v822 = vadd.f32 %v790, %v792
          %v823 = vadd.f32 %v822, %v794
          %v824 = vadd.f32 %v823, %v796
          %v825 = vadd.f32 %v824, %v798
          %v826 = vadd.f32 %v825, %v800
          %v827 = vadd.f32 %v826, %v802
          %v828 = vadd.f32 %v827, %v804
          %v829 = vadd.f32 %v828, %v806
          %v830 = vadd.f32 %v829, %v808
          %v831 = vadd.f32 %v830, %v810
          %v832 = vadd.f32 %v831, %v812
          %v833 = vadd.f32 %v832, %v814
          %v834 = vadd.f32 %v833, %v816
          %v835 = vadd.f32 %v834, %v818
          %v836 = vadd.f32 %v835, %v820
          %v837 = vrot.slane %v836, 4
          %v838 = vadd.f32 %v836, %v837
          %v839 = vrot.slane %v838, 2
          %v840 = vadd.f32 %v838, %v839
          %v841 = vrot.slane %v840, 1
          %v842 = vadd.f32 %v840, %v841
          %v843 = vadd.f32 %v791, %v793
          %v844 = vadd.f32 %v843, %v795
          %v845 = vadd.f32 %v844, %v797
          %v846 = vadd.f32 %v845, %v799
          %v847 = vadd.f32 %v846, %v801
          %v848 = vadd.f32 %v847, %v803
          %v849 = vadd.f32 %v848, %v805
          %v850 = vadd.f32 %v849, %v807
          %v851 = vadd.f32 %v850, %v809
          %v852 = vadd.f32 %v851, %v811
          %v853 = vadd.f32 %v852, %v813
          %v854 = vadd.f32 %v853, %v815
          %v855 = vadd.f32 %v854, %v817
          %v856 = vadd.f32 %v855, %v819
          %v857 = vadd.f32 %v856, %v821
          %v858 = vrot.slane %v857, 4
          %v859 = vadd.f32 %v857, %v858
          %v860 = vrot.slane %v859, 2
          %v861 = vadd.f32 %v859, %v860
          %v862 = vrot.slane %v861, 1
          %v863 = vadd.f32 %v861, %v862
          %v866 = vcombine.low %v842, %v863
          %v868 = vunpack.c.l.s4 1966171168
          %v869 = vunpack.c.0.s8 %v868
          %v870 = vlaneseq
          %v871 = vshrl.u32 %v870, 7
          %v872 = vsub.s32 %v869, %v871
          %v873 = vrot.slane %v866, %v872
          %v875 = vunpack.c.l.s4 1966171168
          %v876 = vunpack.c.0.s8 %v875
          %v877 = vlaneseq
          %v878 = vshrl.u32 %v877, 7
          %v879 = vsub.s32 %v876, %v878
          %v880 = vrot.slane %v873, %v879
          %v882 = vadd.f32 %v789, %v880
          %v883 = vlaneseq
          %vm884 = vcmp.ge.s32.totalorder %v883, 0
          %vm885 = vcmp.lt.s32.totalorder %v883, 256
          %vm886 = vmand %vm884, %vm885
          %887 = vst.msk [vmem:[#allocation3] sm:$0x3] %vm886, %v882
          %v888 = vld [vmem:[#allocation4] sm:$0x3]
          %v889 = vmul.f32 %v660, %v660
          %v890 = vmul.f32 %v662, %v662
          %v891 = vmul.f32 %v664, %v664
          %v892 = vmul.f32 %v666, %v666
          %v893 = vmul.f32 %v670, %v670
          %v894 = vmul.f32 %v672, %v672
          %v895 = vmul.f32 %v674, %v674
          %v896 = vmul.f32 %v676, %v676
          %v897 = vmul.f32 %v680, %v680
          %v898 = vmul.f32 %v682, %v682
          %v899 = vmul.f32 %v684, %v684
          %v900 = vmul.f32 %v686, %v686
          %v901 = vmul.f32 %v690, %v690
          %v902 = vmul.f32 %v692, %v692
          %v903 = vmul.f32 %v694, %v694
          %v904 = vmul.f32 %v696, %v696
          %v905 = vmul.f32 %v700, %v700
          %v906 = vmul.f32 %v702, %v702
          %v907 = vmul.f32 %v704, %v704
          %v908 = vmul.f32 %v706, %v706
          %v909 = vmul.f32 %v710, %v710
          %v910 = vmul.f32 %v712, %v712
          %v911 = vmul.f32 %v714, %v714
          %v912 = vmul.f32 %v716, %v716
          %v913 = vmul.f32 %v720, %v720
          %v914 = vmul.f32 %v722, %v722
          %v915 = vmul.f32 %v724, %v724
          %v916 = vmul.f32 %v726, %v726
          %v917 = vmul.f32 %v730, %v730
          %v918 = vmul.f32 %v732, %v732
          %v919 = vmul.f32 %v734, %v734
          %v920 = vmul.f32 %v736, %v736
          %v921 = vsel %vm773, %v889, 0.0
          %v922 = vsel %vm773, %v890, 0.0
          %v923 = vsel %vm774, %v891, 0.0
          %v924 = vsel %vm774, %v892, 0.0
          %v925 = vsel %vm775, %v893, 0.0
          %v926 = vsel %vm775, %v894, 0.0
          %v927 = vsel %vm776, %v895, 0.0
          %v928 = vsel %vm776, %v896, 0.0
          %v929 = vsel %vm777, %v897, 0.0
          %v930 = vsel %vm777, %v898, 0.0
          %v931 = vsel %vm778, %v899, 0.0
          %v932 = vsel %vm778, %v900, 0.0
          %v933 = vsel %vm779, %v901, 0.0
          %v934 = vsel %vm779, %v902, 0.0
          %v935 = vsel %vm780, %v903, 0.0
          %v936 = vsel %vm780, %v904, 0.0
          %v937 = vsel %vm781, %v905, 0.0
          %v938 = vsel %vm781, %v906, 0.0
          %v939 = vsel %vm782, %v907, 0.0
          %v940 = vsel %vm782, %v908, 0.0
          %v941 = vsel %vm783, %v909, 0.0
          %v942 = vsel %vm783, %v910, 0.0
          %v943 = vsel %vm784, %v911, 0.0
          %v944 = vsel %vm784, %v912, 0.0
          %v945 = vsel %vm785, %v913, 0.0
          %v946 = vsel %vm785, %v914, 0.0
          %v947 = vsel %vm786, %v915, 0.0
          %v948 = vsel %vm786, %v916, 0.0
          %v949 = vsel %vm787, %v917, 0.0
          %v950 = vsel %vm787, %v918, 0.0
          %v951 = vsel %vm788, %v919, 0.0
          %v952 = vsel %vm788, %v920, 0.0
          %v953 = vadd.f32 %v921, %v923
          %v954 = vadd.f32 %v953, %v925
          %v955 = vadd.f32 %v954, %v927
          %v956 = vadd.f32 %v955, %v929
          %v957 = vadd.f32 %v956, %v931
          %v958 = vadd.f32 %v957, %v933
          %v959 = vadd.f32 %v958, %v935
          %v960 = vadd.f32 %v959, %v937
          %v961 = vadd.f32 %v960, %v939
          %v962 = vadd.f32 %v961, %v941
          %v963 = vadd.f32 %v962, %v943
          %v964 = vadd.f32 %v963, %v945
          %v965 = vadd.f32 %v964, %v947
          %v966 = vadd.f32 %v965, %v949
          %v967 = vadd.f32 %v966, %v951
          %v968 = vrot.slane %v967, 4
          %v969 = vadd.f32 %v967, %v968
          %v970 = vrot.slane %v969, 2
          %v971 = vadd.f32 %v969, %v970
          %v972 = vrot.slane %v971, 1
          %v973 = vadd.f32 %v971, %v972
          %v974 = vadd.f32 %v922, %v924
          %v975 = vadd.f32 %v974, %v926
          %v976 = vadd.f32 %v975, %v928
          %v977 = vadd.f32 %v976, %v930
          %v978 = vadd.f32 %v977, %v932
          %v979 = vadd.f32 %v978, %v934
          %v980 = vadd.f32 %v979, %v936
          %v981 = vadd.f32 %v980, %v938
          %v982 = vadd.f32 %v981, %v940
          %v983 = vadd.f32 %v982, %v942
          %v984 = vadd.f32 %v983, %v944
          %v985 = vadd.f32 %v984, %v946
          %v986 = vadd.f32 %v985, %v948
          %v987 = vadd.f32 %v986, %v950
          %v988 = vadd.f32 %v987, %v952
          %v989 = vrot.slane %v988, 4
          %v990 = vadd.f32 %v988, %v989
          %v991 = vrot.slane %v990, 2
          %v992 = vadd.f32 %v990, %v991
          %v993 = vrot.slane %v992, 1
          %v994 = vadd.f32 %v992, %v993
          %v997 = vcombine.low %v973, %v994
          %v999 = vunpack.c.l.s4 1966171168
          %v1000 = vunpack.c.0.s8 %v999
          %v1001 = vlaneseq
          %v1002 = vshrl.u32 %v1001, 7
          %v1003 = vsub.s32 %v1000, %v1002
          %v1004 = vrot.slane %v997, %v1003
          %v1006 = vunpack.c.l.s4 1966171168
          %v1007 = vunpack.c.0.s8 %v1006
          %v1008 = vlaneseq
          %v1009 = vshrl.u32 %v1008, 7
          %v1010 = vsub.s32 %v1007, %v1009
          %v1011 = vrot.slane %v1004, %v1010
          %v1013 = vadd.f32 %v888, %v1011
          %1014 = vst.msk [vmem:[#allocation4] sm:$0x3] %vm886, %v1013
          %s1015 = smul.u32 %s28, 32
          %s1016 = smul.addr %s1015, 8
          %s1017 = scalar_lea.vmem [#allocation2], %s1016
          %1018 = vst [vmem:[%s1017] sm:$0xff] %v660
          %1019 = vst [vmem:[%s1017 + $0x8] sm:$0xff] %v662
          %1020 = vst [vmem:[%s1017 + $0x10] sm:$0xff] %v664
          %1021 = vst [vmem:[%s1017 + $0x18] sm:$0xff] %v666
          %1022 = vst [vmem:[%s1017 + $0x20] sm:$0xff] %v670
          %1023 = vst [vmem:[%s1017 + $0x28] sm:$0xff] %v672
          %1024 = vst [vmem:[%s1017 + $0x30] sm:$0xff] %v674
          %1025 = vst [vmem:[%s1017 + $0x38] sm:$0xff] %v676
          %1026 = vst [vmem:[%s1017 + $0x40] sm:$0xff] %v680
          %1027 = vst [vmem:[%s1017 + $0x48] sm:$0xff] %v682
          %1028 = vst [vmem:[%s1017 + $0x50] sm:$0xff] %v684
          %1029 = vst [vmem:[%s1017 + $0x58] sm:$0xff] %v686
          %1030 = vst [vmem:[%s1017 + $0x60] sm:$0xff] %v690
          %1031 = vst [vmem:[%s1017 + $0x68] sm:$0xff] %v692
          %1032 = vst [vmem:[%s1017 + $0x70] sm:$0xff] %v694
          %1033 = vst [vmem:[%s1017 + $0x78] sm:$0xff] %v696
          %1034 = vst [vmem:[%s1017 + $0x80] sm:$0xff] %v700
          %1035 = vst [vmem:[%s1017 + $0x88] sm:$0xff] %v702
          %1036 = vst [vmem:[%s1017 + $0x90] sm:$0xff] %v704
          %1037 = vst [vmem:[%s1017 + $0x98] sm:$0xff] %v706
          %1038 = vst [vmem:[%s1017 + $0xa0] sm:$0xff] %v710
          %1039 = vst [vmem:[%s1017 + $0xa8] sm:$0xff] %v712
          %1040 = vst [vmem:[%s1017 + $0xb0] sm:$0xff] %v714
          %1041 = vst [vmem:[%s1017 + $0xb8] sm:$0xff] %v716
          %1042 = vst [vmem:[%s1017 + $0xc0] sm:$0xff] %v720
          %1043 = vst [vmem:[%s1017 + $0xc8] sm:$0xff] %v722
          %1044 = vst [vmem:[%s1017 + $0xd0] sm:$0xff] %v724
          %1045 = vst [vmem:[%s1017 + $0xd8] sm:$0xff] %v726
          %1046 = vst [vmem:[%s1017 + $0xe0] sm:$0xff] %v730
          %1047 = vst [vmem:[%s1017 + $0xe8] sm:$0xff] %v732
          %1048 = vst [vmem:[%s1017 + $0xf0] sm:$0xff] %v734
          %1049 = vst [vmem:[%s1017 + $0xf8] sm:$0xff] %v736
          %p1050 = scmp.eq.s32.totalorder %s28, 3
          // Predicated region
          $region61: #{tpu_custom_call.1} parent=55 // pred_check
            %p1051 = pneg %p1050
          $region62: #{tpu_custom_call.1} parent=55 // pred_check_branch
            %1053 = sbr.rel (%p1051) target = $region64
          $region63: #{tpu_custom_call.1} parent=55 // pred_region
            %v1054 = vld [vmem:[#allocation3] sm:$0x3]
            %v1055 = vmul.f32 %v1054, 0.002
            %v1056 = vld [vmem:[#allocation4] sm:$0x3]
            %v1057 = vmul.f32 %v1056, 0.002
            %v1058 = vmul.f32 %v1055, %v1055
            %v1059 = vsub.f32 %v1057, %v1058
            %v1060 = vmax.f32 %v1059, 0.0
            %v1061 = vld [vmem:[%s2] sm:$0x3]
            %v1062 = vadd.f32 %v1060, 1e-05
            %v1063 = vrsqrt.pop %v1062
            %v1064 = vmul.f32 %v1061, %v1063
            %1065 = vst.msk [vmem:[#allocation5] sm:$0x3] %vm886, %v1064
            %v1066 = vld [vmem:[%s3] sm:$0x3]
            %v1067 = vmul.f32 %v1055, %v1064
            %v1068 = vsub.f32 %v1066, %v1067
            %1069 = vst.msk [vmem:[#allocation6] sm:$0x3] %vm886, %v1068
          $region64: #{tpu_custom_call.1} parent=55 // pred_fallthru
            _
        $region56: #{tpu_custom_call.1} parent=39 // pred_fallthru
          _
        %p1070 = scmp.eq.s32.totalorder %s27, 1
        // Predicated region
        $region65: #{tpu_custom_call.1} parent=39 // pred_check
          %p1071 = pneg %p1070
        $region66: #{tpu_custom_call.1} parent=39 // pred_check_branch
          %1073 = sbr.rel (%p1071) target = $region68
        $region67: #{tpu_custom_call.1} parent=39 // pred_region
          %s1074 = smul.u32 %s28, 32
          %s1075 = smul.addr %s1074, 8
          %s1076 = scalar_lea.vmem [#allocation2], %s1075
          %v1077 = vld [vmem:[%s1076] sm:$0xff]
          %v1078 = vld [vmem:[%s1076 + $0x8] sm:$0xff]
          %v1079 = vld [vmem:[%s1076 + $0x10] sm:$0xff]
          %v1080 = vld [vmem:[%s1076 + $0x18] sm:$0xff]
          %v1081 = vld [vmem:[%s1076 + $0x20] sm:$0xff]
          %v1082 = vld [vmem:[%s1076 + $0x28] sm:$0xff]
          %v1083 = vld [vmem:[%s1076 + $0x30] sm:$0xff]
          %v1084 = vld [vmem:[%s1076 + $0x38] sm:$0xff]
          %v1085 = vld [vmem:[%s1076 + $0x40] sm:$0xff]
          %v1086 = vld [vmem:[%s1076 + $0x48] sm:$0xff]
          %v1087 = vld [vmem:[%s1076 + $0x50] sm:$0xff]
          %v1088 = vld [vmem:[%s1076 + $0x58] sm:$0xff]
          %v1089 = vld [vmem:[%s1076 + $0x60] sm:$0xff]
          %v1090 = vld [vmem:[%s1076 + $0x68] sm:$0xff]
          %v1091 = vld [vmem:[%s1076 + $0x70] sm:$0xff]
          %v1092 = vld [vmem:[%s1076 + $0x78] sm:$0xff]
          %v1093 = vld [vmem:[%s1076 + $0x80] sm:$0xff]
          %v1094 = vld [vmem:[%s1076 + $0x88] sm:$0xff]
          %v1095 = vld [vmem:[%s1076 + $0x90] sm:$0xff]
          %v1096 = vld [vmem:[%s1076 + $0x98] sm:$0xff]
          %v1097 = vld [vmem:[%s1076 + $0xa0] sm:$0xff]
          %v1098 = vld [vmem:[%s1076 + $0xa8] sm:$0xff]
          %v1099 = vld [vmem:[%s1076 + $0xb0] sm:$0xff]
          %v1100 = vld [vmem:[%s1076 + $0xb8] sm:$0xff]
          %v1101 = vld [vmem:[%s1076 + $0xc0] sm:$0xff]
          %v1102 = vld [vmem:[%s1076 + $0xc8] sm:$0xff]
          %v1103 = vld [vmem:[%s1076 + $0xd0] sm:$0xff]
          %v1104 = vld [vmem:[%s1076 + $0xd8] sm:$0xff]
          %v1105 = vld [vmem:[%s1076 + $0xe0] sm:$0xff]
          %v1106 = vld [vmem:[%s1076 + $0xe8] sm:$0xff]
          %v1107 = vld [vmem:[%s1076 + $0xf0] sm:$0xff]
          %v1108 = vld [vmem:[%s1076 + $0xf8] sm:$0xff]
          %v1109 = vld [vmem:[#allocation5] sm:$0x3]
          %v1111 = vlaneseq
          %v1112 = vshrl.u32 %v1111, 7
          %v1113 = vsub.s32 0, %v1112
          %v1114 = vrot.slane %v1109, %v1113
          %v1115 = vlaneseq
          %v1116 = vshrl.u32 %v1115, 7
          %v1117 = vsub.s32 1, %v1116
          %v1118 = vrot.slane %v1109, %v1117
          %v1121 = vmul.f32 %v1077, %v1114
          %v1122 = vmul.f32 %v1078, %v1118
          %v1123 = vmul.f32 %v1079, %v1114
          %v1124 = vmul.f32 %v1080, %v1118
          %v1125 = vmul.f32 %v1081, %v1114
          %v1126 = vmul.f32 %v1082, %v1118
          %v1127 = vmul.f32 %v1083, %v1114
          %v1128 = vmul.f32 %v1084, %v1118
          %v1129 = vmul.f32 %v1085, %v1114
          %v1130 = vmul.f32 %v1086, %v1118
          %v1131 = vmul.f32 %v1087, %v1114
          %v1132 = vmul.f32 %v1088, %v1118
          %v1133 = vmul.f32 %v1089, %v1114
          %v1134 = vmul.f32 %v1090, %v1118
          %v1135 = vmul.f32 %v1091, %v1114
          %v1136 = vmul.f32 %v1092, %v1118
          %v1137 = vmul.f32 %v1093, %v1114
          %v1138 = vmul.f32 %v1094, %v1118
          %v1139 = vmul.f32 %v1095, %v1114
          %v1140 = vmul.f32 %v1096, %v1118
          %v1141 = vmul.f32 %v1097, %v1114
          %v1142 = vmul.f32 %v1098, %v1118
          %v1143 = vmul.f32 %v1099, %v1114
          %v1144 = vmul.f32 %v1100, %v1118
          %v1145 = vmul.f32 %v1101, %v1114
          %v1146 = vmul.f32 %v1102, %v1118
          %v1147 = vmul.f32 %v1103, %v1114
          %v1148 = vmul.f32 %v1104, %v1118
          %v1149 = vmul.f32 %v1105, %v1114
          %v1150 = vmul.f32 %v1106, %v1118
          %v1151 = vmul.f32 %v1107, %v1114
          %v1152 = vmul.f32 %v1108, %v1118
          %v1153 = vld [vmem:[#allocation6] sm:$0x3]
          %v1155 = vlaneseq
          %v1156 = vshrl.u32 %v1155, 7
          %v1157 = vsub.s32 0, %v1156
          %v1158 = vrot.slane %v1153, %v1157
          %v1159 = vlaneseq
          %v1160 = vshrl.u32 %v1159, 7
          %v1161 = vsub.s32 1, %v1160
          %v1162 = vrot.slane %v1153, %v1161
          %v1165 = vadd.f32 %v1121, %v1158
          %v1166 = vadd.f32 %v1122, %v1162
          %v1167 = vadd.f32 %v1123, %v1158
          %v1168 = vadd.f32 %v1124, %v1162
          %v1169 = vadd.f32 %v1125, %v1158
          %v1170 = vadd.f32 %v1126, %v1162
          %v1171 = vadd.f32 %v1127, %v1158
          %v1172 = vadd.f32 %v1128, %v1162
          %v1173 = vadd.f32 %v1129, %v1158
          %v1174 = vadd.f32 %v1130, %v1162
          %v1175 = vadd.f32 %v1131, %v1158
          %v1176 = vadd.f32 %v1132, %v1162
          %v1177 = vadd.f32 %v1133, %v1158
          %v1178 = vadd.f32 %v1134, %v1162
          %v1179 = vadd.f32 %v1135, %v1158
          %v1180 = vadd.f32 %v1136, %v1162
          %v1181 = vadd.f32 %v1137, %v1158
          %v1182 = vadd.f32 %v1138, %v1162
          %v1183 = vadd.f32 %v1139, %v1158
          %v1184 = vadd.f32 %v1140, %v1162
          %v1185 = vadd.f32 %v1141, %v1158
          %v1186 = vadd.f32 %v1142, %v1162
          %v1187 = vadd.f32 %v1143, %v1158
          %v1188 = vadd.f32 %v1144, %v1162
          %v1189 = vadd.f32 %v1145, %v1158
          %v1190 = vadd.f32 %v1146, %v1162
          %v1191 = vadd.f32 %v1147, %v1158
          %v1192 = vadd.f32 %v1148, %v1162
          %v1193 = vadd.f32 %v1149, %v1158
          %v1194 = vadd.f32 %v1150, %v1162
          %v1195 = vadd.f32 %v1151, %v1158
          %v1196 = vadd.f32 %v1152, %v1162
          %v1197 = vmax.f32 %v1165, 0.0
          %v1198 = vmax.f32 %v1166, 0.0
          %v1199 = vmax.f32 %v1167, 0.0
          %v1200 = vmax.f32 %v1168, 0.0
          %v1201 = vmax.f32 %v1169, 0.0
          %v1202 = vmax.f32 %v1170, 0.0
          %v1203 = vmax.f32 %v1171, 0.0
          %v1204 = vmax.f32 %v1172, 0.0
          %v1205 = vmax.f32 %v1173, 0.0
          %v1206 = vmax.f32 %v1174, 0.0
          %v1207 = vmax.f32 %v1175, 0.0
          %v1208 = vmax.f32 %v1176, 0.0
          %v1209 = vmax.f32 %v1177, 0.0
          %v1210 = vmax.f32 %v1178, 0.0
          %v1211 = vmax.f32 %v1179, 0.0
          %v1212 = vmax.f32 %v1180, 0.0
          %v1213 = vmax.f32 %v1181, 0.0
          %v1214 = vmax.f32 %v1182, 0.0
          %v1215 = vmax.f32 %v1183, 0.0
          %v1216 = vmax.f32 %v1184, 0.0
          %v1217 = vmax.f32 %v1185, 0.0
          %v1218 = vmax.f32 %v1186, 0.0
          %v1219 = vmax.f32 %v1187, 0.0
          %v1220 = vmax.f32 %v1188, 0.0
          %v1221 = vmax.f32 %v1189, 0.0
          %v1222 = vmax.f32 %v1190, 0.0
          %v1223 = vmax.f32 %v1191, 0.0
          %v1224 = vmax.f32 %v1192, 0.0
          %v1225 = vmax.f32 %v1193, 0.0
          %v1226 = vmax.f32 %v1194, 0.0
          %v1227 = vmax.f32 %v1195, 0.0
          %v1228 = vmax.f32 %v1196, 0.0
          %v1229 = vpack.c.bf16 %v1199, %v1197
          %v1230 = vpack.c.bf16 %v1200, %v1198
          %v1231 = vpack.c.bf16 %v1203, %v1201
          %v1232 = vpack.c.bf16 %v1204, %v1202
          %v1233 = vpack.c.bf16 %v1207, %v1205
          %v1234 = vpack.c.bf16 %v1208, %v1206
          %v1235 = vpack.c.bf16 %v1211, %v1209
          %v1236 = vpack.c.bf16 %v1212, %v1210
          %v1237 = vpack.c.bf16 %v1215, %v1213
          %v1238 = vpack.c.bf16 %v1216, %v1214
          %v1239 = vpack.c.bf16 %v1219, %v1217
          %v1240 = vpack.c.bf16 %v1220, %v1218
          %v1241 = vpack.c.bf16 %v1223, %v1221
          %v1242 = vpack.c.bf16 %v1224, %v1222
          %v1243 = vpack.c.bf16 %v1227, %v1225
          %v1244 = vpack.c.bf16 %v1228, %v1226
          %v1245 = vld [vmem:[#allocation12] sm:$0xf]
          %v1246 = vld [vmem:[#allocation12 + $0x4] sm:$0xf]
          %v1247 = vld [vmem:[#allocation12 + $0x8] sm:$0xf]
          %v1248 = vld [vmem:[#allocation12 + $0xc] sm:$0xf]
          %v1249 = vld [vmem:[#allocation12 + $0x10] sm:$0xf]
          %v1250 = vld [vmem:[#allocation12 + $0x14] sm:$0xf]
          %v1251 = vld [vmem:[#allocation12 + $0x18] sm:$0xf]
          %v1252 = vld [vmem:[#allocation12 + $0x1c] sm:$0xf]
          %v1253 = vld [vmem:[#allocation12 + $0x20] sm:$0xf]
          %v1254 = vld [vmem:[#allocation12 + $0x24] sm:$0xf]
          %v1255 = vld [vmem:[#allocation12 + $0x28] sm:$0xf]
          %v1256 = vld [vmem:[#allocation12 + $0x2c] sm:$0xf]
          %v1257 = vld [vmem:[#allocation12 + $0x30] sm:$0xf]
          %v1258 = vld [vmem:[#allocation12 + $0x34] sm:$0xf]
          %v1259 = vld [vmem:[#allocation12 + $0x38] sm:$0xf]
          %v1260 = vld [vmem:[#allocation12 + $0x3c] sm:$0xf]
          %v1261 = vld [vmem:[#allocation12 + $0x40] sm:$0xf]
          %v1262 = vld [vmem:[#allocation12 + $0x44] sm:$0xf]
          %v1263 = vld [vmem:[#allocation12 + $0x48] sm:$0xf]
          %v1264 = vld [vmem:[#allocation12 + $0x4c] sm:$0xf]
          %v1265 = vld [vmem:[#allocation12 + $0x50] sm:$0xf]
          %v1266 = vld [vmem:[#allocation12 + $0x54] sm:$0xf]
          %v1267 = vld [vmem:[#allocation12 + $0x58] sm:$0xf]
          %v1268 = vld [vmem:[#allocation12 + $0x5c] sm:$0xf]
          %v1269 = vld [vmem:[#allocation12 + $0x60] sm:$0xf]
          %v1270 = vld [vmem:[#allocation12 + $0x64] sm:$0xf]
          %v1271 = vld [vmem:[#allocation12 + $0x68] sm:$0xf]
          %v1272 = vld [vmem:[#allocation12 + $0x6c] sm:$0xf]
          %v1273 = vld [vmem:[#allocation12 + $0x70] sm:$0xf]
          %v1274 = vld [vmem:[#allocation12 + $0x74] sm:$0xf]
          %v1275 = vld [vmem:[#allocation12 + $0x78] sm:$0xf]
          %v1276 = vld [vmem:[#allocation12 + $0x7c] sm:$0xf]
          %v1309 = vunpack.c.l.b16 %v1245
          %v1310 = vunpack.c.l.b16 %v1246
          %v1311 = vunpack.c.l.b16 %v1247
          %v1312 = vunpack.c.l.b16 %v1248
          %v1313 = vunpack.c.l.b16 %v1249
          %v1314 = vunpack.c.l.b16 %v1250
          %v1315 = vunpack.c.l.b16 %v1251
          %v1316 = vunpack.c.l.b16 %v1252
          %v1317 = vunpack.c.l.b16 %v1253
          %v1318 = vunpack.c.l.b16 %v1254
          %v1319 = vunpack.c.l.b16 %v1255
          %v1320 = vunpack.c.l.b16 %v1256
          %v1321 = vunpack.c.l.b16 %v1257
          %v1322 = vunpack.c.l.b16 %v1258
          %v1323 = vunpack.c.l.b16 %v1259
          %v1324 = vunpack.c.l.b16 %v1260
          %v1325 = vunpack.c.l.b16 %v1261
          %v1326 = vunpack.c.l.b16 %v1262
          %v1327 = vunpack.c.l.b16 %v1263
          %v1328 = vunpack.c.l.b16 %v1264
          %v1329 = vunpack.c.l.b16 %v1265
          %v1330 = vunpack.c.l.b16 %v1266
          %v1331 = vunpack.c.l.b16 %v1267
          %v1332 = vunpack.c.l.b16 %v1268
          %v1333 = vunpack.c.l.b16 %v1269
          %v1334 = vunpack.c.l.b16 %v1270
          %v1335 = vunpack.c.l.b16 %v1271
          %v1336 = vunpack.c.l.b16 %v1272
          %v1337 = vunpack.c.l.b16 %v1273
          %v1338 = vunpack.c.l.b16 %v1274
          %v1339 = vunpack.c.l.b16 %v1275
          %v1340 = vunpack.c.l.b16 %v1276
          %v1341 = vpack.c.b16 %v1310, %v1309
          %v1342 = vpack.c.b16 %v1312, %v1311
          %v1343 = vpack.c.b16 %v1314, %v1313
          %v1344 = vpack.c.b16 %v1316, %v1315
          %v1345 = vpack.c.b16 %v1318, %v1317
          %v1346 = vpack.c.b16 %v1320, %v1319
          %v1347 = vpack.c.b16 %v1322, %v1321
          %v1348 = vpack.c.b16 %v1324, %v1323
          %v1349 = vpack.c.b16 %v1326, %v1325
          %v1350 = vpack.c.b16 %v1328, %v1327
          %v1351 = vpack.c.b16 %v1330, %v1329
          %v1352 = vpack.c.b16 %v1332, %v1331
          %v1353 = vpack.c.b16 %v1334, %v1333
          %v1354 = vpack.c.b16 %v1336, %v1335
          %v1355 = vpack.c.b16 %v1338, %v1337
          %v1356 = vpack.c.b16 %v1340, %v1339
          %1373 = vmatprep.subr.bf16.mxu0 0
          %1374 = vmatpush1.bf16.msra.mxu0 %v1341
          %1375 = vmatprep.subr.bf16.mxu0 0
          %1376 = vmatpush1.bf16.msra.mxu0 %v1342
          %1377 = vmatprep.subr.bf16.mxu0 0
          %1378 = vmatpush1.bf16.msra.mxu0 %v1343
          %1379 = vmatprep.subr.bf16.mxu0 0
          %1380 = vmatpush1.bf16.msra.mxu0 %v1344
          %1381 = vmatprep.subr.bf16.mxu0 0
          %1382 = vmatpush1.bf16.msra.mxu0 %v1345
          %1383 = vmatprep.subr.bf16.mxu0 0
          %1384 = vmatpush1.bf16.msra.mxu0 %v1346
          %1385 = vmatprep.subr.bf16.mxu0 0
          %1386 = vmatpush1.bf16.msra.mxu0 %v1347
          %1387 = vmatprep.subr.bf16.mxu0 0
          %1388 = vmatpush1.bf16.msra.mxu0 %v1348
          %1389 = vmatprep.subr.bf16.mxu0 0
          %1390 = vmatpush1.bf16.msra.mxu0 %v1349
          %1391 = vmatprep.subr.bf16.mxu0 0
          %1392 = vmatpush1.bf16.msra.mxu0 %v1350
          %1393 = vmatprep.subr.bf16.mxu0 0
          %1394 = vmatpush1.bf16.msra.mxu0 %v1351
          %1395 = vmatprep.subr.bf16.mxu0 0
          %1396 = vmatpush1.bf16.msra.mxu0 %v1352
          %1397 = vmatprep.subr.bf16.mxu0 0
          %1398 = vmatpush1.bf16.msra.mxu0 %v1353
          %1399 = vmatprep.subr.bf16.mxu0 0
          %1400 = vmatpush1.bf16.msra.mxu0 %v1354
          %1401 = vmatprep.subr.bf16.mxu0 0
          %1402 = vmatpush1.bf16.msra.mxu0 %v1355
          %1403 = vmatprep.subr.bf16.mxu0 0
          %1404 = vmatpush1.bf16.msra.mxu0 %v1356
          %1405 = vmatprep.mubr.bf16.mxu0 %v1230
          %1406 = vmatmul.mubr.bf16.gmra.mrb[0].mxu0 %v1229
          %v1407 = vpop.f32.mrb[0].mxu0
          %v1408 = vadd.f32 0.0, %v1407
          %v1409 = vpop.f32.mrb[0].mxu0
          %v1410 = vpop.f32.mrb[0].mxu0
          %v1411 = vadd.f32 0.0, %v1410
          %v1412 = vpop.f32.mrb[0].mxu0
          %1413 = vmatprep.mubr.bf16.mxu0 %v1232
          %1414 = vmatmul.mubr.bf16.gmra.mrb[0].mxu0 %v1231
          %v1415 = vpop.f32.mrb[0].mxu0
          %v1416 = vadd.f32 0.0, %v1415
          %v1417 = vpop.f32.mrb[0].mxu0
          %v1418 = vpop.f32.mrb[0].mxu0
          %v1419 = vadd.f32 0.0, %v1418
          %v1420 = vpop.f32.mrb[0].mxu0
          %1421 = vmatprep.mubr.bf16.mxu0 %v1234
          %1422 = vmatmul.mubr.bf16.gmra.mrb[0].mxu0 %v1233
          %v1423 = vpop.f32.mrb[0].mxu0
          %v1424 = vadd.f32 0.0, %v1423
          %v1425 = vpop.f32.mrb[0].mxu0
          %v1426 = vpop.f32.mrb[0].mxu0
          %v1427 = vadd.f32 0.0, %v1426
          %v1428 = vpop.f32.mrb[0].mxu0
          %1429 = vmatprep.mubr.bf16.mxu0 %v1236
          %1430 = vmatmul.mubr.bf16.gmra.mrb[0].mxu0 %v1235
          %v1431 = vpop.f32.mrb[0].mxu0
          %v1432 = vadd.f32 0.0, %v1431
          %v1433 = vpop.f32.mrb[0].mxu0
          %v1434 = vpop.f32.mrb[0].mxu0
          %v1435 = vadd.f32 0.0, %v1434
          %v1436 = vpop.f32.mrb[0].mxu0
          %1437 = vmatprep.mubr.bf16.mxu0 %v1238
          %1438 = vmatmul.mubr.bf16.gmra.mrb[0].mxu0 %v1237
          %v1439 = vpop.f32.mrb[0].mxu0
          %v1440 = vadd.f32 0.0, %v1439
          %v1441 = vpop.f32.mrb[0].mxu0
          %v1442 = vpop.f32.mrb[0].mxu0
          %v1443 = vadd.f32 0.0, %v1442
          %v1444 = vpop.f32.mrb[0].mxu0
          %1445 = vmatprep.mubr.bf16.mxu0 %v1240
          %1446 = vmatmul.mubr.bf16.gmra.mrb[0].mxu0 %v1239
          %v1447 = vpop.f32.mrb[0].mxu0
          %v1448 = vadd.f32 0.0, %v1447
          %v1449 = vpop.f32.mrb[0].mxu0
          %v1450 = vpop.f32.mrb[0].mxu0
          %v1451 = vadd.f32 0.0, %v1450
          %v1452 = vpop.f32.mrb[0].mxu0
          %1453 = vmatprep.mubr.bf16.mxu0 %v1242
          %1454 = vmatmul.mubr.bf16.gmra.mrb[0].mxu0 %v1241
          %v1455 = vpop.f32.mrb[0].mxu0
          %v1456 = vadd.f32 0.0, %v1455
          %v1457 = vpop.f32.mrb[0].mxu0
          %v1458 = vpop.f32.mrb[0].mxu0
          %v1459 = vadd.f32 0.0, %v1458
          %v1460 = vpop.f32.mrb[0].mxu0
          %1461 = vmatprep.mubr.bf16.mxu0 %v1244
          %1462 = vmatmul.mubr.bf16.gmra.mrb[0].mxu0 %v1243
          %v1463 = vpop.f32.mrb[0].mxu0
          %v1464 = vadd.f32 0.0, %v1463
          %v1465 = vpop.f32.mrb[0].mxu0
          %v1466 = vpop.f32.mrb[0].mxu0
          %v1467 = vadd.f32 0.0, %v1466
          %v1468 = vpop.f32.mrb[0].mxu0
          %1469 = vdwg.mxu0
          %v1470 = vmul.f32 %v1408, %v1408
          %v1471 = vmul.f32 %v1411, %v1411
          %v1472 = vmul.f32 %v1416, %v1416
          %v1473 = vmul.f32 %v1419, %v1419
          %v1474 = vmul.f32 %v1424, %v1424
          %v1475 = vmul.f32 %v1427, %v1427
          %v1476 = vmul.f32 %v1432, %v1432
          %v1477 = vmul.f32 %v1435, %v1435
          %v1478 = vmul.f32 %v1440, %v1440
          %v1479 = vmul.f32 %v1443, %v1443
          %v1480 = vmul.f32 %v1448, %v1448
          %v1481 = vmul.f32 %v1451, %v1451
          %v1482 = vmul.f32 %v1456, %v1456
          %v1483 = vmul.f32 %v1459, %v1459
          %v1484 = vmul.f32 %v1464, %v1464
          %v1485 = vmul.f32 %v1467, %v1467
          %1486 = vadd.xlane.f32.xlu0 %v1470
          %v1487 = vpop.xlane.xlu0 %1486
          %1488 = vadd.xlane.f32.xlu0 %v1471
          %v1489 = vpop.xlane.xlu0 %1488
          %1490 = vadd.xlane.f32.xlu0 %v1472
          %v1491 = vpop.xlane.xlu0 %1490
          %1492 = vadd.xlane.f32.xlu0 %v1473
          %v1493 = vpop.xlane.xlu0 %1492
          %1494 = vadd.xlane.f32.xlu0 %v1474
          %v1495 = vpop.xlane.xlu0 %1494
          %1496 = vadd.xlane.f32.xlu0 %v1475
          %v1497 = vpop.xlane.xlu0 %1496
          %1498 = vadd.xlane.f32.xlu0 %v1476
          %v1499 = vpop.xlane.xlu0 %1498
          %1500 = vadd.xlane.f32.xlu0 %v1477
          %v1501 = vpop.xlane.xlu0 %1500
          %1502 = vadd.xlane.f32.xlu0 %v1478
          %v1503 = vpop.xlane.xlu0 %1502
          %1504 = vadd.xlane.f32.xlu0 %v1479
          %v1505 = vpop.xlane.xlu0 %1504
          %1506 = vadd.xlane.f32.xlu0 %v1480
          %v1507 = vpop.xlane.xlu0 %1506
          %1508 = vadd.xlane.f32.xlu0 %v1481
          %v1509 = vpop.xlane.xlu0 %1508
          %1510 = vadd.xlane.f32.xlu0 %v1482
          %v1511 = vpop.xlane.xlu0 %1510
          %1512 = vadd.xlane.f32.xlu0 %v1483
          %v1513 = vpop.xlane.xlu0 %1512
          %1514 = vadd.xlane.f32.xlu0 %v1484
          %v1515 = vpop.xlane.xlu0 %1514
          %1516 = vadd.xlane.f32.xlu0 %v1485
          %v1517 = vpop.xlane.xlu0 %1516
          %v1518 = vmax.f32 %v1487, 1e-24
          %v1519 = vmax.f32 %v1489, 1e-24
          %v1520 = vmax.f32 %v1491, 1e-24
          %v1521 = vmax.f32 %v1493, 1e-24
          %v1522 = vmax.f32 %v1495, 1e-24
          %v1523 = vmax.f32 %v1497, 1e-24
          %v1524 = vmax.f32 %v1499, 1e-24
          %v1525 = vmax.f32 %v1501, 1e-24
          %v1526 = vmax.f32 %v1503, 1e-24
          %v1527 = vmax.f32 %v1505, 1e-24
          %v1528 = vmax.f32 %v1507, 1e-24
          %v1529 = vmax.f32 %v1509, 1e-24
          %v1530 = vmax.f32 %v1511, 1e-24
          %v1531 = vmax.f32 %v1513, 1e-24
          %v1532 = vmax.f32 %v1515, 1e-24
          %v1533 = vmax.f32 %v1517, 1e-24
          %v1534 = vrsqrt.pop %v1518
          %v1535 = vrsqrt.pop %v1519
          %v1536 = vrsqrt.pop %v1520
          %v1537 = vrsqrt.pop %v1521
          %v1538 = vrsqrt.pop %v1522
          %v1539 = vrsqrt.pop %v1523
          %v1540 = vrsqrt.pop %v1524
          %v1541 = vrsqrt.pop %v1525
          %v1542 = vrsqrt.pop %v1526
          %v1543 = vrsqrt.pop %v1527
          %v1544 = vrsqrt.pop %v1528
          %v1545 = vrsqrt.pop %v1529
          %v1546 = vrsqrt.pop %v1530
          %v1547 = vrsqrt.pop %v1531
          %v1548 = vrsqrt.pop %v1532
          %v1549 = vrsqrt.pop %v1533
          %v1550 = vmul.f32 %v1408, %v1534
          %v1551 = vmul.f32 %v1411, %v1535
          %v1552 = vmul.f32 %v1416, %v1536
          %v1553 = vmul.f32 %v1419, %v1537
          %v1554 = vmul.f32 %v1424, %v1538
          %v1555 = vmul.f32 %v1427, %v1539
          %v1556 = vmul.f32 %v1432, %v1540
          %v1557 = vmul.f32 %v1435, %v1541
          %v1558 = vmul.f32 %v1440, %v1542
          %v1559 = vmul.f32 %v1443, %v1543
          %v1560 = vmul.f32 %v1448, %v1544
          %v1561 = vmul.f32 %v1451, %v1545
          %v1562 = vmul.f32 %v1456, %v1546
          %v1563 = vmul.f32 %v1459, %v1547
          %v1564 = vmul.f32 %v1464, %v1548
          %v1565 = vmul.f32 %v1467, %v1549
          %1566 = vst [vmem:[%s305] sm:$0xff] %v1550
          %1567 = vst [vmem:[%s305 + $0x8] sm:$0xff] %v1551
          %1568 = vst [vmem:[%s305 + $0x10] sm:$0xff] %v1552
          %1569 = vst [vmem:[%s305 + $0x18] sm:$0xff] %v1553
          %1570 = vst [vmem:[%s305 + $0x20] sm:$0xff] %v1554
          %1571 = vst [vmem:[%s305 + $0x28] sm:$0xff] %v1555
          %1572 = vst [vmem:[%s305 + $0x30] sm:$0xff] %v1556
          %1573 = vst [vmem:[%s305 + $0x38] sm:$0xff] %v1557
          %1574 = vst [vmem:[%s305 + $0x40] sm:$0xff] %v1558
          %1575 = vst [vmem:[%s305 + $0x48] sm:$0xff] %v1559
          %1576 = vst [vmem:[%s305 + $0x50] sm:$0xff] %v1560
          %1577 = vst [vmem:[%s305 + $0x58] sm:$0xff] %v1561
          %1578 = vst [vmem:[%s305 + $0x60] sm:$0xff] %v1562
          %1579 = vst [vmem:[%s305 + $0x68] sm:$0xff] %v1563
          %1580 = vst [vmem:[%s305 + $0x70] sm:$0xff] %v1564
          %1581 = vst [vmem:[%s305 + $0x78] sm:$0xff] %v1565
        $region68: #{tpu_custom_call.1} parent=39 // pred_fallthru
          _
        %s1582 = sand.u32 %s163, 1
        %s1583 = scalar_lea.sflag [#allocation9], %s1582
        %s1584 = sand.u32 %s163, 1
        %s1585 = smul.addr %s1584, 128
        %s1586 = scalar_lea.vmem [#allocation13], %s1585
        // Predicated region
        $region69: #{tpu_custom_call.1} parent=39 // pred_check
          %p1587 = pneg %p173
        $region70: #{tpu_custom_call.1} parent=39 // pred_check_branch
          %1589 = sbr.rel (%p1587) target = $region72
        $region71: #{tpu_custom_call.1} parent=39 // pred_region
          %s1590 = smul.u32 %s28, %s27
          %s1591 = smul.u32 16, %s1590
          %s1592 = ssub.s32 63, %s1591
          %p1593 = scmp.lt.s32.totalorder %s1592, 16
          %s1594 = scalar_select %p1593, %s1592, 16
          %s1595 = smul.u32 128, %s1594
          %s1597 = ssub.s32 2048, %s1595
          %1598 = vsyncadd %s1583, %s1597
          %p1599 = scmp.ne.s32.totalorder 0, %s1595
          %s1600 = smul.addr %s1591, 128
          %s1601 = scalar_lea.hbm %s5, %s1600
          %s1602 = smul.u32 8, %s1594
          %s1603 = sshll.u32 %s1586, 4
          %s1604 = int_to_ptr.vmem [resolvable:$true] %s1603
          %s1605 = sshll.u32 %s1602, 4
          %1609 = dma.vmem_to_hbm [thread:$0]  (%p1599), %s1604, %s1605, %s1601, %s1583, 128, 128, 8
        $region72: #{tpu_custom_call.1} parent=39 // pred_fallthru
          _
      $region40: #{tpu_custom_call.1} parent=5 // pred_fallthru
        _
      %p1610 = scmp.le.s32.totalorder 2, %s18
      // Predicated region
      $region73: #{tpu_custom_call.1} parent=5 // pred_check
        %p1611 = pneg %p1610
      $region74: #{tpu_custom_call.1} parent=5 // pred_check_branch
        %1613 = sbr.rel (%p1611) target = $region76
      $region75: #{tpu_custom_call.1} parent=5 // pred_region
        %s1614 = ssub.s32 %s18, 2
        // Predicated region
        $region77: #{tpu_custom_call.1} parent=75 // pred_check
          %p1615 = pneg %p179
        $region78: #{tpu_custom_call.1} parent=75 // pred_check_branch
          %1617 = sbr.rel (%p1615) target = $region80
        $region79: #{tpu_custom_call.1} parent=75 // pred_region
          %s1618 = sand.u32 %s164, 1
          %s1619 = scalar_lea.sflag [#allocation9], %s1618
          %s1620 = sand.u32 %s164, 1
          %s1621 = smul.addr %s1620, 128
          %s1622 = scalar_lea.vmem [#allocation13], %s1621
          %1623 = dma.done %s1619, 2048
        $region80: #{tpu_custom_call.1} parent=75 // pred_fallthru
          _
      $region76: #{tpu_custom_call.1} parent=5 // pred_fallthru
        _
    $region6: #{tpu_custom_call.1} parent=1 // loop_footer
      %s22 = sadd.s32 1, %s18
    $region7: #{tpu_custom_call.1} parent=1 // loop_footer_branch
      %17 = sbr.rel target = $region3
    $region8: #{tpu_custom_call.1} parent=1 // loop_exit
      _
    %1624 = vsyncpa [#allocation8], 1
    %s1625 = scalar_lea.sflag [#allocation8], 1
    %1626 = vsyncpa %s1625, 1
    %1627 = vsyncpa [#allocation11], 1
    %1628 = vsyncpa [#allocation9], 1
    %s1629 = scalar_lea.sflag [#allocation9], 1
    %1630 = vsyncpa %s1629, 1

</llo_original>
